<compile_context>
chip_gen: v7x
topology: tpu7x:2x2x1
jax: 0.10.0
libtpu: 0.0.40
codegen_flags: <defaults>
</compile_context>

<pallas_src>
import numpy as np

import jax
import jax.numpy as jnp
from jax.experimental import pallas as pl
from jax.experimental.pallas import tpu as pltpu

# ----------------------------- configuration -----------------------------
B, IN_CH, H, W = 2, 3, 16, 16      # CIFAR-like input (NCHW on the host side)
C = 8                              # backbone width; W * C == 128 lanes exactly
NUM_CLASSES = 2                    # after adaptation(initial_increment=2)
NOUT_PAD = 8                       # sublane-padded classifier rows
LANES = W * C                      # 128
EPS = 1e-5


# ------------------------------ Pallas kernel -----------------------------
def resnet6_kernel(x_ref,
                   w1_ref, s1_ref, b1_ref,
                   w11_ref, s11_ref, b11_ref,
                   w12_ref, s12_ref, b12_ref,
                   w21_ref, s21_ref, b21_ref,
                   w22_ref, s22_ref, b22_ref,
                   fcw_ref, fcb_ref,
                   o_ref):
    """One batch sample per grid step.  Activations are (H, W*C) lane-packed."""
    h, lanes = x_ref.shape                                  # (16, 128)
    row = jax.lax.broadcasted_iota(jnp.int32, (h, lanes), 0)
    top_row = row == 0
    bot_row = row == h - 1

    def conv_bn(act, w_ref, s_ref, b_ref):
        # 3x3 stride-1 SAME conv + folded (inference) BN on a (H, W*C) tile.
        # dx is folded into three banded (W*C, W*C) weights (one per dy tap);
        # the dy tap is a sublane roll with zero fill at the image boundary.
        a32 = act.astype(jnp.float32)
        xc = a32.astype(jnp.bfloat16)                                    # dy=1
        xd = jnp.where(top_row, 0.0,
                       pltpu.roll(a32, shift=1, axis=0)
                       ).astype(jnp.bfloat16)                            # dy=0
        xu = jnp.where(bot_row, 0.0,
                       pltpu.roll(a32, shift=h - 1, axis=0)
                       ).astype(jnp.bfloat16)                            # dy=2
        acc = jnp.dot(xc, w_ref[1], preferred_element_type=jnp.float32)
        acc = acc + jnp.dot(xd, w_ref[0], preferred_element_type=jnp.float32)
        acc = acc + jnp.dot(xu, w_ref[2], preferred_element_type=jnp.float32)
        return acc * s_ref[...] + b_ref[...]                             # f32

    # --- stem: conv1 + BN + ReLU ---
    a = jnp.maximum(conv_bn(x_ref[...], w1_ref, s1_ref, b1_ref), 0.0)

    # --- BasicBlock 1 ---
    t = jnp.maximum(conv_bn(a, w11_ref, s11_ref, b11_ref), 0.0)
    t = conv_bn(t, w12_ref, s12_ref, b12_ref)
    a = jnp.maximum(a + t, 0.0)

    # --- BasicBlock 2 ---
    t = jnp.maximum(conv_bn(a, w21_ref, s21_ref, b21_ref), 0.0)
    t = conv_bn(t, w22_ref, s22_ref, b22_ref)
    a = jnp.maximum(a + t, 0.0)

    # --- global average pool + incremental fc head (f32, VPU/XLU only) ---
    pooled = jnp.sum(a, axis=0, keepdims=True)              # (1, W*C) f32
    # fcw rows are per-class weights tiled over w and pre-scaled by 1/(H*W).
    logits = jnp.sum(pooled * fcw_ref[...], axis=-1, keepdims=True) + fcb_ref[...]
    o_ref[...] = logits                                      # (NOUT_PAD, 1) f32


# --------------------------- host-side packing -----------------------------
def pack_input(x_nchw):
    """(B, CIN, H, W) f32 -> (B, H, W*C) bf16 with lane index w*C + ci."""
    xs = jnp.transpose(x_nchw, (0, 2, 3, 1)).astype(jnp.float32)   # (B,H,W,CIN)
    bsz, h, w, cin = xs.shape
    out = jnp.zeros((bsz, h, w, C), jnp.float32).at[..., :cin].set(xs)
    return out.reshape(bsz, h, w * C).astype(jnp.bfloat16)


def pack_conv_weight(w_hwio):
    """(3, 3, cin, cout) f32 -> (3, W*C, W*C) bf16 banded matrices (one per dy).

    mats[dy, wi*C + ci, wo*C + co] = w[dy, wi - wo + 1, ci, co]; out-of-range
    wi gives an implicit zero, which reproduces SAME padding along width.
    """
    wnp = np.asarray(w_hwio, np.float32)
    _, _, cin, cout = wnp.shape
    mats = np.zeros((3, LANES, LANES), np.float32)
    for dy in range(3):
        for dx in range(3):
            for wo in range(W):
                wi = wo + dx - 1
                if 0 <= wi < W:
                    mats[dy, wi * C:wi * C + cin, wo * C:wo * C + cout] = wnp[dy, dx]
    return jnp.asarray(mats, jnp.bfloat16)


def pack_bn_vec(v_1c):
    """(1, C) f32 -> (1, W*C) f32, tiled so lane w*C + c holds v[c]."""
    return jnp.tile(v_1c.reshape(-1), (W,)).reshape(1, LANES).astype(jnp.float32)


def pack_fc_head(fcw, fcb):
    """fcw (C, NUM_CLASSES), fcb (1, NUM_CLASSES) -> ((NOUT_PAD, W*C), (NOUT_PAD, 1)).

    Row j of the packed weight holds class-j weights tiled over w and scaled by
    1/(H*W), so the in-kernel head is  sum_lanes(col_sums * fcw_row) + bias.
    """
    wt = jnp.zeros((NOUT_PAD, C), jnp.float32).at[:NUM_CLASSES, :].set(fcw.T)
    wt = jnp.tile(wt, (1, W)) * (1.0 / (H * W))              # (NOUT_PAD, W*C)
    bt = jnp.zeros((NOUT_PAD, 1), jnp.float32).at[:NUM_CLASSES, 0].set(fcb[0])
    return wt, bt


# ------------------------------ host wrapper ------------------------------
def resnet6_forward(x_nchw, params):
    (w1, s1, b1,
     w11, s11, b11, w12, s12, b12,
     w21, s21, b21, w22, s22, b22,
     fcw, fcb) = params

    xpack = pack_input(x_nchw)                               # (B, H, W*C) bf16
    bsz = xpack.shape[0]

    conv_mats = [pack_conv_weight(cw) for cw in (w1, w11, w12, w21, w22)]
    bn_s = [pack_bn_vec(s) for s in (s1, s11, s12, s21, s22)]
    bn_b = [pack_bn_vec(v) for v in (b1, b11, b12, b21, b22)]
    fcw_p, fcb_p = pack_fc_head(fcw, fcb)

    flat_inputs = (xpack,
                   conv_mats[0], bn_s[0], bn_b[0],
                   conv_mats[1], bn_s[1], bn_b[1],
                   conv_mats[2], bn_s[2], bn_b[2],
                   conv_mats[3], bn_s[3], bn_b[3],
                   conv_mats[4], bn_s[4], bn_b[4],
                   fcw_p, fcb_p)

    def const_spec(p):
        return pl.BlockSpec(p.shape, lambda i, _nd=p.ndim: (0,) * _nd)

    in_specs = ([pl.BlockSpec((None, H, LANES), lambda i: (i, 0, 0))]
                + [const_spec(p) for p in flat_inputs[1:]])

    out = pl.pallas_call(
        resnet6_kernel,
        out_shape=jax.ShapeDtypeStruct((bsz, NOUT_PAD, 1), jnp.float32),
        grid_spec=pltpu.PrefetchScalarGridSpec(
            num_scalar_prefetch=0,
            grid=(bsz,),
            in_specs=in_specs,
            out_specs=pl.BlockSpec((None, NOUT_PAD, 1), lambda i: (i, 0, 0))),
        compiler_params=pltpu.CompilerParams(
            dimension_semantics=("parallel",)),
    )(*flat_inputs)

    # drop the sublane padding on the classifier axis
    return out.reshape(bsz, NOUT_PAD)[:, :NUM_CLASSES]


# --------------------------- pure-JAX reference -----------------------------
def reference_forward(x_nchw, params):
    (w1, s1, b1,
     w11, s11, b11, w12, s12, b12,
     w21, s21, b21, w22, s22, b22,
     fcw, fcb) = params
    x = jnp.transpose(x_nchw, (0, 2, 3, 1)).astype(jnp.float32)

    def conv_bn(x, w, s, b):
        y = jax.lax.conv_general_dilated(
            x, w, (1, 1), 'SAME', dimension_numbers=('NHWC', 'HWIO', 'NHWC'))
        return y * s.reshape(1, 1, 1, -1) + b.reshape(1, 1, 1, -1)

    a = jax.nn.relu(conv_bn(x, w1, s1, b1))
    t = jax.nn.relu(conv_bn(a, w11, s11, b11))
    t = conv_bn(t, w12, s12, b12)
    a = jax.nn.relu(a + t)
    t = jax.nn.relu(conv_bn(a, w21, s21, b21))
    t = conv_bn(t, w22, s22, b22)
    a = jax.nn.relu(a + t)
    pooled = jnp.mean(a, axis=(1, 2))                        # (B, C)
    return pooled @ fcw + fcb                                # (B, NUM_CLASSES)


# --------------------------- deterministic params --------------------------
def _conv_init(key, cin, cout):
    w_ = jax.random.normal(key, (3, 3, cin, cout), jnp.float32)
    return w_ * (2.0 / (9 * cin)) ** 0.5


def _bn_fold(key, c):
    k1, k2, k3, k4 = jax.random.split(key, 4)
    gamma = 1.0 + 0.1 * jax.random.normal(k1, (c,), jnp.float32)
    beta = 0.1 * jax.random.normal(k2, (c,), jnp.float32)
    mean = 0.1 * jax.random.normal(k3, (c,), jnp.float32)
    var = jnp.abs(1.0 + 0.1 * jax.random.normal(k4, (c,), jnp.float32))
    scale = gamma / jnp.sqrt(var + EPS)
    bias = beta - mean * scale
    return scale.reshape(1, c), bias.reshape(1, c)


def make_params(key):
    ks = jax.random.split(key, 12)
    w1 = _conv_init(ks[0], IN_CH, C)
    s1, b1 = _bn_fold(ks[1], C)
    w11 = _conv_init(ks[2], C, C)
    s11, b11 = _bn_fold(ks[3], C)
    w12 = _conv_init(ks[4], C, C)
    s12, b12 = _bn_fold(ks[5], C)
    w21 = _conv_init(ks[6], C, C)
    s21, b21 = _bn_fold(ks[7], C)
    w22 = _conv_init(ks[8], C, C)
    s22, b22 = _bn_fold(ks[9], C)
    # fc head: freshly initialized post-adaptation incremental classifier
    fcw = jax.random.normal(ks[10], (C, NUM_CLASSES), jnp.float32) / (C ** 0.5)
    fcb = 0.01 * jax.random.normal(ks[11], (1, NUM_CLASSES), jnp.float32)
    return (w1, s1, b1,
            w11, s11, b11, w12, s12, b12,
            w21, s21, b21, w22, s22, b22,
            fcw, fcb)


# ---------------------------------- main -----------------------------------
if __name__ == "__main__":
    key = jax.random.PRNGKey(0)
    kx, kp = jax.random.split(key)
    x = jax.random.normal(kx, (B, IN_CH, H, W), jnp.float32)   # NCHW like PyTorch
    params = make_params(kp)

    out = jax.block_until_ready(resnet6_forward(x, params))
    assert out.shape == (B, NUM_CLASSES), out.shape
    assert bool(jnp.all(jnp.isfinite(out)))

    ref = reference_forward(x, params)
    max_err = float(jnp.max(jnp.abs(out - ref)))
    assert max_err < 5e-2, f"max |kernel - reference| = {max_err}"

    print("KERNEL_OK")
</pallas_src>

<mosaic_0001>
module attributes {stable_mosaic.version = 11 : i64} {
  func.func @resnet6_kernel(%arg0: i32, %arg1: memref<1x16x128xbf16, #tpu.memory_space<vmem>>, %arg2: memref<3x128x128xbf16, #tpu.memory_space<vmem>>, %arg3: memref<1x128xf32, #tpu.memory_space<vmem>>, %arg4: memref<1x128xf32, #tpu.memory_space<vmem>>, %arg5: memref<3x128x128xbf16, #tpu.memory_space<vmem>>, %arg6: memref<1x128xf32, #tpu.memory_space<vmem>>, %arg7: memref<1x128xf32, #tpu.memory_space<vmem>>, %arg8: memref<3x128x128xbf16, #tpu.memory_space<vmem>>, %arg9: memref<1x128xf32, #tpu.memory_space<vmem>>, %arg10: memref<1x128xf32, #tpu.memory_space<vmem>>, %arg11: memref<3x128x128xbf16, #tpu.memory_space<vmem>>, %arg12: memref<1x128xf32, #tpu.memory_space<vmem>>, %arg13: memref<1x128xf32, #tpu.memory_space<vmem>>, %arg14: memref<3x128x128xbf16, #tpu.memory_space<vmem>>, %arg15: memref<1x128xf32, #tpu.memory_space<vmem>>, %arg16: memref<1x128xf32, #tpu.memory_space<vmem>>, %arg17: memref<8x128xf32, #tpu.memory_space<vmem>>, %arg18: memref<8x1xf32, #tpu.memory_space<vmem>>, %arg19: memref<1x8x1xf32, #tpu.memory_space<vmem>>) attributes {dimension_semantics = [#tpu.dimension_semantics<parallel>], iteration_bounds = array<i64: 2>, scalar_prefetch = 0 : i64, scratch_operands = 0 : i64, tpu.core_type = #tpu.core_type<tc>, window_params = [{transform_indices = @transform_0, window_bounds = array<i64: 1, 16, 128>}, {pipeline_mode = #tpu.pipeline_mode<synchronous>, transform_indices = @transform_1, window_bounds = array<i64: 3, 128, 128>}, {pipeline_mode = #tpu.pipeline_mode<synchronous>, transform_indices = @transform_2, window_bounds = array<i64: 1, 128>}, {pipeline_mode = #tpu.pipeline_mode<synchronous>, transform_indices = @transform_3, window_bounds = array<i64: 1, 128>}, {pipeline_mode = #tpu.pipeline_mode<synchronous>, transform_indices = @transform_4, window_bounds = array<i64: 3, 128, 128>}, {pipeline_mode = #tpu.pipeline_mode<synchronous>, transform_indices = @transform_5, window_bounds = array<i64: 1, 128>}, {pipeline_mode = #tpu.pipeline_mode<synchronous>, transform_indices = @transform_6, window_bounds = array<i64: 1, 128>}, {pipeline_mode = #tpu.pipeline_mode<synchronous>, transform_indices = @transform_7, window_bounds = array<i64: 3, 128, 128>}, {pipeline_mode = #tpu.pipeline_mode<synchronous>, transform_indices = @transform_8, window_bounds = array<i64: 1, 128>}, {pipeline_mode = #tpu.pipeline_mode<synchronous>, transform_indices = @transform_9, window_bounds = array<i64: 1, 128>}, {pipeline_mode = #tpu.pipeline_mode<synchronous>, transform_indices = @transform_10, window_bounds = array<i64: 3, 128, 128>}, {pipeline_mode = #tpu.pipeline_mode<synchronous>, transform_indices = @transform_11, window_bounds = array<i64: 1, 128>}, {pipeline_mode = #tpu.pipeline_mode<synchronous>, transform_indices = @transform_12, window_bounds = array<i64: 1, 128>}, {pipeline_mode = #tpu.pipeline_mode<synchronous>, transform_indices = @transform_13, window_bounds = array<i64: 3, 128, 128>}, {pipeline_mode = #tpu.pipeline_mode<synchronous>, transform_indices = @transform_14, window_bounds = array<i64: 1, 128>}, {pipeline_mode = #tpu.pipeline_mode<synchronous>, transform_indices = @transform_15, window_bounds = array<i64: 1, 128>}, {pipeline_mode = #tpu.pipeline_mode<synchronous>, transform_indices = @transform_16, window_bounds = array<i64: 8, 128>}, {pipeline_mode = #tpu.pipeline_mode<synchronous>, transform_indices = @transform_17, window_bounds = array<i64: 8, 1>}, {transform_indices = @transform_18, window_bounds = array<i64: 1, 8, 1>}]} {
    %0 = tpu.iota {dimensions = array<i32: 0>} : vector<16x128xi32>
    %c0_i32 = arith.constant 0 : i32
    %1 = vector.broadcast %c0_i32 : i32 to vector<16x128xi32>
    %2 = arith.cmpi eq, %0, %1 : vector<16x128xi32>
    %c15_i32 = arith.constant 15 : i32
    %3 = vector.broadcast %c15_i32 : i32 to vector<16x128xi32>
    %4 = arith.cmpi eq, %0, %3 : vector<16x128xi32>
    %c0 = arith.constant 0 : index
    %c0_0 = arith.constant 0 : index
    %c0_1 = arith.constant 0 : index
    %5 = vector.load %arg1[%c0, %c0_0, %c0_1] : memref<1x16x128xbf16, #tpu.memory_space<vmem>>, vector<1x16x128xbf16>
    %6 = vector.shape_cast %5 : vector<1x16x128xbf16> to vector<16x128xbf16>
    %7 = arith.extf %6 : vector<16x128xbf16> to vector<16x128xf32>
    %8 = arith.truncf %7 : vector<16x128xf32> to vector<16x128xbf16>
    %c1_i32 = arith.constant 1 : i32
    %9 = tpu.dynamic_rotate %7 by %c1_i32 dim 0 : vector<16x128xf32>, i32 -> vector<16x128xf32>
    %cst = arith.constant 0.000000e+00 : f32
    %10 = vector.broadcast %cst : f32 to vector<16x128xf32>
    %11 = arith.select %2, %10, %9 : vector<16x128xi1>, vector<16x128xf32>
    %12 = arith.truncf %11 : vector<16x128xf32> to vector<16x128xbf16>
    %c15_i32_2 = arith.constant 15 : i32
    %13 = tpu.dynamic_rotate %7 by %c15_i32_2 dim 0 : vector<16x128xf32>, i32 -> vector<16x128xf32>
    %cst_3 = arith.constant 0.000000e+00 : f32
    %14 = vector.broadcast %cst_3 : f32 to vector<16x128xf32>
    %15 = arith.select %4, %14, %13 : vector<16x128xi1>, vector<16x128xf32>
    %16 = arith.truncf %15 : vector<16x128xf32> to vector<16x128xbf16>
    %c1 = arith.constant 1 : index
    %c0_4 = arith.constant 0 : index
    %c0_5 = arith.constant 0 : index
    %17 = vector.load %arg2[%c1, %c0_4, %c0_5] : memref<3x128x128xbf16, #tpu.memory_space<vmem>>, vector<1x128x128xbf16>
    %18 = vector.shape_cast %17 : vector<1x128x128xbf16> to vector<128x128xbf16>
    %cst_6 = arith.constant dense<0.000000e+00> : vector<16x128xf32>
    %19 = tpu.matmul %8, %18, %cst_6 {dimension_numbers = #tpu.dot_dimension_numbers<[1], [0], [0], [1], [0, 0, 1, 1], [], []>} : vector<16x128xbf16>, vector<128x128xbf16>, vector<16x128xf32> -> vector<16x128xf32>
    %c0_7 = arith.constant 0 : index
    %c0_8 = arith.constant 0 : index
    %c0_9 = arith.constant 0 : index
    %20 = vector.load %arg2[%c0_7, %c0_8, %c0_9] : memref<3x128x128xbf16, #tpu.memory_space<vmem>>, vector<1x128x128xbf16>
    %21 = vector.shape_cast %20 : vector<1x128x128xbf16> to vector<128x128xbf16>
    %cst_10 = arith.constant dense<0.000000e+00> : vector<16x128xf32>
    %22 = tpu.matmul %12, %21, %cst_10 {dimension_numbers = #tpu.dot_dimension_numbers<[1], [0], [0], [1], [0, 0, 1, 1], [], []>} : vector<16x128xbf16>, vector<128x128xbf16>, vector<16x128xf32> -> vector<16x128xf32>
    %23 = arith.addf %19, %22 : vector<16x128xf32>
    %c2 = arith.constant 2 : index
    %c0_11 = arith.constant 0 : index
    %c0_12 = arith.constant 0 : index
    %24 = vector.load %arg2[%c2, %c0_11, %c0_12] : memref<3x128x128xbf16, #tpu.memory_space<vmem>>, vector<1x128x128xbf16>
    %25 = vector.shape_cast %24 : vector<1x128x128xbf16> to vector<128x128xbf16>
    %cst_13 = arith.constant dense<0.000000e+00> : vector<16x128xf32>
    %26 = tpu.matmul %16, %25, %cst_13 {dimension_numbers = #tpu.dot_dimension_numbers<[1], [0], [0], [1], [0, 0, 1, 1], [], []>} : vector<16x128xbf16>, vector<128x128xbf16>, vector<16x128xf32> -> vector<16x128xf32>
    %27 = arith.addf %23, %26 : vector<16x128xf32>
    %c0_14 = arith.constant 0 : index
    %c0_15 = arith.constant 0 : index
    %28 = vector.load %arg3[%c0_14, %c0_15] : memref<1x128xf32, #tpu.memory_space<vmem>>, vector<1x128xf32>
    %29 = vector.broadcast %28 : vector<1x128xf32> to vector<16x128xf32>
    %30 = arith.mulf %27, %29 : vector<16x128xf32>
    %c0_16 = arith.constant 0 : index
    %c0_17 = arith.constant 0 : index
    %31 = vector.load %arg4[%c0_16, %c0_17] : memref<1x128xf32, #tpu.memory_space<vmem>>, vector<1x128xf32>
    %32 = vector.broadcast %31 : vector<1x128xf32> to vector<16x128xf32>
    %33 = arith.addf %30, %32 : vector<16x128xf32>
    %cst_18 = arith.constant 0.000000e+00 : f32
    %34 = vector.broadcast %cst_18 : f32 to vector<16x128xf32>
    %35 = arith.maximumf %33, %34 : vector<16x128xf32>
    %36 = arith.truncf %35 : vector<16x128xf32> to vector<16x128xbf16>
    %c1_i32_19 = arith.constant 1 : i32
    %37 = tpu.dynamic_rotate %35 by %c1_i32_19 dim 0 : vector<16x128xf32>, i32 -> vector<16x128xf32>
    %cst_20 = arith.constant 0.000000e+00 : f32
    %38 = vector.broadcast %cst_20 : f32 to vector<16x128xf32>
    %39 = arith.select %2, %38, %37 : vector<16x128xi1>, vector<16x128xf32>
    %40 = arith.truncf %39 : vector<16x128xf32> to vector<16x128xbf16>
    %c15_i32_21 = arith.constant 15 : i32
    %41 = tpu.dynamic_rotate %35 by %c15_i32_21 dim 0 : vector<16x128xf32>, i32 -> vector<16x128xf32>
    %cst_22 = arith.constant 0.000000e+00 : f32
    %42 = vector.broadcast %cst_22 : f32 to vector<16x128xf32>
    %43 = arith.select %4, %42, %41 : vector<16x128xi1>, vector<16x128xf32>
    %44 = arith.truncf %43 : vector<16x128xf32> to vector<16x128xbf16>
    %c1_23 = arith.constant 1 : index
    %c0_24 = arith.constant 0 : index
    %c0_25 = arith.constant 0 : index
    %45 = vector.load %arg5[%c1_23, %c0_24, %c0_25] : memref<3x128x128xbf16, #tpu.memory_space<vmem>>, vector<1x128x128xbf16>
    %46 = vector.shape_cast %45 : vector<1x128x128xbf16> to vector<128x128xbf16>
    %cst_26 = arith.constant dense<0.000000e+00> : vector<16x128xf32>
    %47 = tpu.matmul %36, %46, %cst_26 {dimension_numbers = #tpu.dot_dimension_numbers<[1], [0], [0], [1], [0, 0, 1, 1], [], []>} : vector<16x128xbf16>, vector<128x128xbf16>, vector<16x128xf32> -> vector<16x128xf32>
    %c0_27 = arith.constant 0 : index
    %c0_28 = arith.constant 0 : index
    %c0_29 = arith.constant 0 : index
    %48 = vector.load %arg5[%c0_27, %c0_28, %c0_29] : memref<3x128x128xbf16, #tpu.memory_space<vmem>>, vector<1x128x128xbf16>
    %49 = vector.shape_cast %48 : vector<1x128x128xbf16> to vector<128x128xbf16>
    %cst_30 = arith.constant dense<0.000000e+00> : vector<16x128xf32>
    %50 = tpu.matmul %40, %49, %cst_30 {dimension_numbers = #tpu.dot_dimension_numbers<[1], [0], [0], [1], [0, 0, 1, 1], [], []>} : vector<16x128xbf16>, vector<128x128xbf16>, vector<16x128xf32> -> vector<16x128xf32>
    %51 = arith.addf %47, %50 : vector<16x128xf32>
    %c2_31 = arith.constant 2 : index
    %c0_32 = arith.constant 0 : index
    %c0_33 = arith.constant 0 : index
    %52 = vector.load %arg5[%c2_31, %c0_32, %c0_33] : memref<3x128x128xbf16, #tpu.memory_space<vmem>>, vector<1x128x128xbf16>
    %53 = vector.shape_cast %52 : vector<1x128x128xbf16> to vector<128x128xbf16>
    %cst_34 = arith.constant dense<0.000000e+00> : vector<16x128xf32>
    %54 = tpu.matmul %44, %53, %cst_34 {dimension_numbers = #tpu.dot_dimension_numbers<[1], [0], [0], [1], [0, 0, 1, 1], [], []>} : vector<16x128xbf16>, vector<128x128xbf16>, vector<16x128xf32> -> vector<16x128xf32>
    %55 = arith.addf %51, %54 : vector<16x128xf32>
    %c0_35 = arith.constant 0 : index
    %c0_36 = arith.constant 0 : index
    %56 = vector.load %arg6[%c0_35, %c0_36] : memref<1x128xf32, #tpu.memory_space<vmem>>, vector<1x128xf32>
    %57 = vector.broadcast %56 : vector<1x128xf32> to vector<16x128xf32>
    %58 = arith.mulf %55, %57 : vector<16x128xf32>
    %c0_37 = arith.constant 0 : index
    %c0_38 = arith.constant 0 : index
    %59 = vector.load %arg7[%c0_37, %c0_38] : memref<1x128xf32, #tpu.memory_space<vmem>>, vector<1x128xf32>
    %60 = vector.broadcast %59 : vector<1x128xf32> to vector<16x128xf32>
    %61 = arith.addf %58, %60 : vector<16x128xf32>
    %cst_39 = arith.constant 0.000000e+00 : f32
    %62 = vector.broadcast %cst_39 : f32 to vector<16x128xf32>
    %63 = arith.maximumf %61, %62 : vector<16x128xf32>
    %64 = arith.truncf %63 : vector<16x128xf32> to vector<16x128xbf16>
    %c1_i32_40 = arith.constant 1 : i32
    %65 = tpu.dynamic_rotate %63 by %c1_i32_40 dim 0 : vector<16x128xf32>, i32 -> vector<16x128xf32>
    %cst_41 = arith.constant 0.000000e+00 : f32
    %66 = vector.broadcast %cst_41 : f32 to vector<16x128xf32>
    %67 = arith.select %2, %66, %65 : vector<16x128xi1>, vector<16x128xf32>
    %68 = arith.truncf %67 : vector<16x128xf32> to vector<16x128xbf16>
    %c15_i32_42 = arith.constant 15 : i32
    %69 = tpu.dynamic_rotate %63 by %c15_i32_42 dim 0 : vector<16x128xf32>, i32 -> vector<16x128xf32>
    %cst_43 = arith.constant 0.000000e+00 : f32
    %70 = vector.broadcast %cst_43 : f32 to vector<16x128xf32>
    %71 = arith.select %4, %70, %69 : vector<16x128xi1>, vector<16x128xf32>
    %72 = arith.truncf %71 : vector<16x128xf32> to vector<16x128xbf16>
    %c1_44 = arith.constant 1 : index
    %c0_45 = arith.constant 0 : index
    %c0_46 = arith.constant 0 : index
    %73 = vector.load %arg8[%c1_44, %c0_45, %c0_46] : memref<3x128x128xbf16, #tpu.memory_space<vmem>>, vector<1x128x128xbf16>
    %74 = vector.shape_cast %73 : vector<1x128x128xbf16> to vector<128x128xbf16>
    %cst_47 = arith.constant dense<0.000000e+00> : vector<16x128xf32>
    %75 = tpu.matmul %64, %74, %cst_47 {dimension_numbers = #tpu.dot_dimension_numbers<[1], [0], [0], [1], [0, 0, 1, 1], [], []>} : vector<16x128xbf16>, vector<128x128xbf16>, vector<16x128xf32> -> vector<16x128xf32>
    %c0_48 = arith.constant 0 : index
    %c0_49 = arith.constant 0 : index
    %c0_50 = arith.constant 0 : index
    %76 = vector.load %arg8[%c0_48, %c0_49, %c0_50] : memref<3x128x128xbf16, #tpu.memory_space<vmem>>, vector<1x128x128xbf16>
    %77 = vector.shape_cast %76 : vector<1x128x128xbf16> to vector<128x128xbf16>
    %cst_51 = arith.constant dense<0.000000e+00> : vector<16x128xf32>
    %78 = tpu.matmul %68, %77, %cst_51 {dimension_numbers = #tpu.dot_dimension_numbers<[1], [0], [0], [1], [0, 0, 1, 1], [], []>} : vector<16x128xbf16>, vector<128x128xbf16>, vector<16x128xf32> -> vector<16x128xf32>
    %79 = arith.addf %75, %78 : vector<16x128xf32>
    %c2_52 = arith.constant 2 : index
    %c0_53 = arith.constant 0 : index
    %c0_54 = arith.constant 0 : index
    %80 = vector.load %arg8[%c2_52, %c0_53, %c0_54] : memref<3x128x128xbf16, #tpu.memory_space<vmem>>, vector<1x128x128xbf16>
    %81 = vector.shape_cast %80 : vector<1x128x128xbf16> to vector<128x128xbf16>
    %cst_55 = arith.constant dense<0.000000e+00> : vector<16x128xf32>
    %82 = tpu.matmul %72, %81, %cst_55 {dimension_numbers = #tpu.dot_dimension_numbers<[1], [0], [0], [1], [0, 0, 1, 1], [], []>} : vector<16x128xbf16>, vector<128x128xbf16>, vector<16x128xf32> -> vector<16x128xf32>
    %83 = arith.addf %79, %82 : vector<16x128xf32>
    %c0_56 = arith.constant 0 : index
    %c0_57 = arith.constant 0 : index
    %84 = vector.load %arg9[%c0_56, %c0_57] : memref<1x128xf32, #tpu.memory_space<vmem>>, vector<1x128xf32>
    %85 = vector.broadcast %84 : vector<1x128xf32> to vector<16x128xf32>
    %86 = arith.mulf %83, %85 : vector<16x128xf32>
    %c0_58 = arith.constant 0 : index
    %c0_59 = arith.constant 0 : index
    %87 = vector.load %arg10[%c0_58, %c0_59] : memref<1x128xf32, #tpu.memory_space<vmem>>, vector<1x128xf32>
    %88 = vector.broadcast %87 : vector<1x128xf32> to vector<16x128xf32>
    %89 = arith.addf %86, %88 : vector<16x128xf32>
    %90 = arith.addf %35, %89 : vector<16x128xf32>
    %cst_60 = arith.constant 0.000000e+00 : f32
    %91 = vector.broadcast %cst_60 : f32 to vector<16x128xf32>
    %92 = arith.maximumf %90, %91 : vector<16x128xf32>
    %93 = arith.truncf %92 : vector<16x128xf32> to vector<16x128xbf16>
    %c1_i32_61 = arith.constant 1 : i32
    %94 = tpu.dynamic_rotate %92 by %c1_i32_61 dim 0 : vector<16x128xf32>, i32 -> vector<16x128xf32>
    %cst_62 = arith.constant 0.000000e+00 : f32
    %95 = vector.broadcast %cst_62 : f32 to vector<16x128xf32>
    %96 = arith.select %2, %95, %94 : vector<16x128xi1>, vector<16x128xf32>
    %97 = arith.truncf %96 : vector<16x128xf32> to vector<16x128xbf16>
    %c15_i32_63 = arith.constant 15 : i32
    %98 = tpu.dynamic_rotate %92 by %c15_i32_63 dim 0 : vector<16x128xf32>, i32 -> vector<16x128xf32>
    %cst_64 = arith.constant 0.000000e+00 : f32
    %99 = vector.broadcast %cst_64 : f32 to vector<16x128xf32>
    %100 = arith.select %4, %99, %98 : vector<16x128xi1>, vector<16x128xf32>
    %101 = arith.truncf %100 : vector<16x128xf32> to vector<16x128xbf16>
    %c1_65 = arith.constant 1 : index
    %c0_66 = arith.constant 0 : index
    %c0_67 = arith.constant 0 : index
    %102 = vector.load %arg11[%c1_65, %c0_66, %c0_67] : memref<3x128x128xbf16, #tpu.memory_space<vmem>>, vector<1x128x128xbf16>
    %103 = vector.shape_cast %102 : vector<1x128x128xbf16> to vector<128x128xbf16>
    %cst_68 = arith.constant dense<0.000000e+00> : vector<16x128xf32>
    %104 = tpu.matmul %93, %103, %cst_68 {dimension_numbers = #tpu.dot_dimension_numbers<[1], [0], [0], [1], [0, 0, 1, 1], [], []>} : vector<16x128xbf16>, vector<128x128xbf16>, vector<16x128xf32> -> vector<16x128xf32>
    %c0_69 = arith.constant 0 : index
    %c0_70 = arith.constant 0 : index
    %c0_71 = arith.constant 0 : index
    %105 = vector.load %arg11[%c0_69, %c0_70, %c0_71] : memref<3x128x128xbf16, #tpu.memory_space<vmem>>, vector<1x128x128xbf16>
    %106 = vector.shape_cast %105 : vector<1x128x128xbf16> to vector<128x128xbf16>
    %cst_72 = arith.constant dense<0.000000e+00> : vector<16x128xf32>
    %107 = tpu.matmul %97, %106, %cst_72 {dimension_numbers = #tpu.dot_dimension_numbers<[1], [0], [0], [1], [0, 0, 1, 1], [], []>} : vector<16x128xbf16>, vector<128x128xbf16>, vector<16x128xf32> -> vector<16x128xf32>
    %108 = arith.addf %104, %107 : vector<16x128xf32>
    %c2_73 = arith.constant 2 : index
    %c0_74 = arith.constant 0 : index
    %c0_75 = arith.constant 0 : index
    %109 = vector.load %arg11[%c2_73, %c0_74, %c0_75] : memref<3x128x128xbf16, #tpu.memory_space<vmem>>, vector<1x128x128xbf16>
    %110 = vector.shape_cast %109 : vector<1x128x128xbf16> to vector<128x128xbf16>
    %cst_76 = arith.constant dense<0.000000e+00> : vector<16x128xf32>
    %111 = tpu.matmul %101, %110, %cst_76 {dimension_numbers = #tpu.dot_dimension_numbers<[1], [0], [0], [1], [0, 0, 1, 1], [], []>} : vector<16x128xbf16>, vector<128x128xbf16>, vector<16x128xf32> -> vector<16x128xf32>
    %112 = arith.addf %108, %111 : vector<16x128xf32>
    %c0_77 = arith.constant 0 : index
    %c0_78 = arith.constant 0 : index
    %113 = vector.load %arg12[%c0_77, %c0_78] : memref<1x128xf32, #tpu.memory_space<vmem>>, vector<1x128xf32>
    %114 = vector.broadcast %113 : vector<1x128xf32> to vector<16x128xf32>
    %115 = arith.mulf %112, %114 : vector<16x128xf32>
    %c0_79 = arith.constant 0 : index
    %c0_80 = arith.constant 0 : index
    %116 = vector.load %arg13[%c0_79, %c0_80] : memref<1x128xf32, #tpu.memory_space<vmem>>, vector<1x128xf32>
    %117 = vector.broadcast %116 : vector<1x128xf32> to vector<16x128xf32>
    %118 = arith.addf %115, %117 : vector<16x128xf32>
    %cst_81 = arith.constant 0.000000e+00 : f32
    %119 = vector.broadcast %cst_81 : f32 to vector<16x128xf32>
    %120 = arith.maximumf %118, %119 : vector<16x128xf32>
    %121 = arith.truncf %120 : vector<16x128xf32> to vector<16x128xbf16>
    %c1_i32_82 = arith.constant 1 : i32
    %122 = tpu.dynamic_rotate %120 by %c1_i32_82 dim 0 : vector<16x128xf32>, i32 -> vector<16x128xf32>
    %cst_83 = arith.constant 0.000000e+00 : f32
    %123 = vector.broadcast %cst_83 : f32 to vector<16x128xf32>
    %124 = arith.select %2, %123, %122 : vector<16x128xi1>, vector<16x128xf32>
    %125 = arith.truncf %124 : vector<16x128xf32> to vector<16x128xbf16>
    %c15_i32_84 = arith.constant 15 : i32
    %126 = tpu.dynamic_rotate %120 by %c15_i32_84 dim 0 : vector<16x128xf32>, i32 -> vector<16x128xf32>
    %cst_85 = arith.constant 0.000000e+00 : f32
    %127 = vector.broadcast %cst_85 : f32 to vector<16x128xf32>
    %128 = arith.select %4, %127, %126 : vector<16x128xi1>, vector<16x128xf32>
    %129 = arith.truncf %128 : vector<16x128xf32> to vector<16x128xbf16>
    %c1_86 = arith.constant 1 : index
    %c0_87 = arith.constant 0 : index
    %c0_88 = arith.constant 0 : index
    %130 = vector.load %arg14[%c1_86, %c0_87, %c0_88] : memref<3x128x128xbf16, #tpu.memory_space<vmem>>, vector<1x128x128xbf16>
    %131 = vector.shape_cast %130 : vector<1x128x128xbf16> to vector<128x128xbf16>
    %cst_89 = arith.constant dense<0.000000e+00> : vector<16x128xf32>
    %132 = tpu.matmul %121, %131, %cst_89 {dimension_numbers = #tpu.dot_dimension_numbers<[1], [0], [0], [1], [0, 0, 1, 1], [], []>} : vector<16x128xbf16>, vector<128x128xbf16>, vector<16x128xf32> -> vector<16x128xf32>
    %c0_90 = arith.constant 0 : index
    %c0_91 = arith.constant 0 : index
    %c0_92 = arith.constant 0 : index
    %133 = vector.load %arg14[%c0_90, %c0_91, %c0_92] : memref<3x128x128xbf16, #tpu.memory_space<vmem>>, vector<1x128x128xbf16>
    %134 = vector.shape_cast %133 : vector<1x128x128xbf16> to vector<128x128xbf16>
    %cst_93 = arith.constant dense<0.000000e+00> : vector<16x128xf32>
    %135 = tpu.matmul %125, %134, %cst_93 {dimension_numbers = #tpu.dot_dimension_numbers<[1], [0], [0], [1], [0, 0, 1, 1], [], []>} : vector<16x128xbf16>, vector<128x128xbf16>, vector<16x128xf32> -> vector<16x128xf32>
    %136 = arith.addf %132, %135 : vector<16x128xf32>
    %c2_94 = arith.constant 2 : index
    %c0_95 = arith.constant 0 : index
    %c0_96 = arith.constant 0 : index
    %137 = vector.load %arg14[%c2_94, %c0_95, %c0_96] : memref<3x128x128xbf16, #tpu.memory_space<vmem>>, vector<1x128x128xbf16>
    %138 = vector.shape_cast %137 : vector<1x128x128xbf16> to vector<128x128xbf16>
    %cst_97 = arith.constant dense<0.000000e+00> : vector<16x128xf32>
    %139 = tpu.matmul %129, %138, %cst_97 {dimension_numbers = #tpu.dot_dimension_numbers<[1], [0], [0], [1], [0, 0, 1, 1], [], []>} : vector<16x128xbf16>, vector<128x128xbf16>, vector<16x128xf32> -> vector<16x128xf32>
    %140 = arith.addf %136, %139 : vector<16x128xf32>
    %c0_98 = arith.constant 0 : index
    %c0_99 = arith.constant 0 : index
    %141 = vector.load %arg15[%c0_98, %c0_99] : memref<1x128xf32, #tpu.memory_space<vmem>>, vector<1x128xf32>
    %142 = vector.broadcast %141 : vector<1x128xf32> to vector<16x128xf32>
    %143 = arith.mulf %140, %142 : vector<16x128xf32>
    %c0_100 = arith.constant 0 : index
    %c0_101 = arith.constant 0 : index
    %144 = vector.load %arg16[%c0_100, %c0_101] : memref<1x128xf32, #tpu.memory_space<vmem>>, vector<1x128xf32>
    %145 = vector.broadcast %144 : vector<1x128xf32> to vector<16x128xf32>
    %146 = arith.addf %143, %145 : vector<16x128xf32>
    %147 = arith.addf %92, %146 : vector<16x128xf32>
    %cst_102 = arith.constant 0.000000e+00 : f32
    %148 = vector.broadcast %cst_102 : f32 to vector<16x128xf32>
    %149 = arith.maximumf %147, %148 : vector<16x128xf32>
    %cst_103 = arith.constant dense<0.000000e+00> : vector<128xf32>
    %150 = vector.multi_reduction <add>, %149, %cst_103 [0] : vector<16x128xf32> to vector<128xf32>
    %151 = vector.shape_cast %150 : vector<128xf32> to vector<1x128xf32>
    %c0_104 = arith.constant 0 : index
    %c0_105 = arith.constant 0 : index
    %152 = vector.load %arg17[%c0_104, %c0_105] : memref<8x128xf32, #tpu.memory_space<vmem>>, vector<8x128xf32>
    %153 = vector.broadcast %151 : vector<1x128xf32> to vector<8x128xf32>
    %154 = arith.mulf %153, %152 : vector<8x128xf32>
    %cst_106 = arith.constant dense<0.000000e+00> : vector<8xf32>
    %155 = vector.multi_reduction <add>, %154, %cst_106 [1] : vector<8x128xf32> to vector<8xf32>
    %156 = vector.shape_cast %155 : vector<8xf32> to vector<8x1xf32>
    %c0_107 = arith.constant 0 : index
    %c0_108 = arith.constant 0 : index
    %157 = vector.load %arg18[%c0_107, %c0_108] : memref<8x1xf32, #tpu.memory_space<vmem>>, vector<8x1xf32>
    %158 = arith.addf %156, %157 : vector<8x1xf32>
    %c0_109 = arith.constant 0 : index
    %c0_110 = arith.constant 0 : index
    %c0_111 = arith.constant 0 : index
    %159 = vector.load %arg19[%c0_109, %c0_110, %c0_111] : memref<1x8x1xf32, #tpu.memory_space<vmem>>, vector<1x8x1xf32>
    %160 = vector.shape_cast %159 : vector<1x8x1xf32> to vector<8x1xf32>
    %161 = vector.shape_cast %158 : vector<8x1xf32> to vector<1x8x1xf32>
    tpu.vector_store %arg19[%c0_109, %c0_110, %c0_111], %161 {strides = array<i32>} : memref<1x8x1xf32, #tpu.memory_space<vmem>>, vector<1x8x1xf32>,
    return
  }
  func.func @transform_0(%arg0: i32) -> (i32, i32, i32) {
    %c0_i32 = arith.constant 0 : i32
    %c0_i32_0 = arith.constant 0 : i32
    %c0_i32_1 = arith.constant 0 : i32
    return %arg0, %c0_i32, %c0_i32_0 : i32, i32, i32
  }
  func.func @transform_1(%arg0: i32) -> (i32, i32, i32) {
    %c0_i32 = arith.constant 0 : i32
    %c0_i32_0 = arith.constant 0 : i32
    %c0_i32_1 = arith.constant 0 : i32
    %c0_i32_2 = arith.constant 0 : i32
    return %c0_i32, %c0_i32_0, %c0_i32_1 : i32, i32, i32
  }
  func.func @transform_2(%arg0: i32) -> (i32, i32) {
    %c0_i32 = arith.constant 0 : i32
    %c0_i32_0 = arith.constant 0 : i32
    %c0_i32_1 = arith.constant 0 : i32
    return %c0_i32, %c0_i32_0 : i32, i32
  }
  func.func @transform_3(%arg0: i32) -> (i32, i32) {
    %c0_i32 = arith.constant 0 : i32
    %c0_i32_0 = arith.constant 0 : i32
    %c0_i32_1 = arith.constant 0 : i32
    return %c0_i32, %c0_i32_0 : i32, i32
  }
  func.func @transform_4(%arg0: i32) -> (i32, i32, i32) {
    %c0_i32 = arith.constant 0 : i32
    %c0_i32_0 = arith.constant 0 : i32
    %c0_i32_1 = arith.constant 0 : i32
    %c0_i32_2 = arith.constant 0 : i32
    return %c0_i32, %c0_i32_0, %c0_i32_1 : i32, i32, i32
  }
  func.func @transform_5(%arg0: i32) -> (i32, i32) {
    %c0_i32 = arith.constant 0 : i32
    %c0_i32_0 = arith.constant 0 : i32
    %c0_i32_1 = arith.constant 0 : i32
    return %c0_i32, %c0_i32_0 : i32, i32
  }
  func.func @transform_6(%arg0: i32) -> (i32, i32) {
    %c0_i32 = arith.constant 0 : i32
    %c0_i32_0 = arith.constant 0 : i32
    %c0_i32_1 = arith.constant 0 : i32
    return %c0_i32, %c0_i32_0 : i32, i32
  }
  func.func @transform_7(%arg0: i32) -> (i32, i32, i32) {
    %c0_i32 = arith.constant 0 : i32
    %c0_i32_0 = arith.constant 0 : i32
    %c0_i32_1 = arith.constant 0 : i32
    %c0_i32_2 = arith.constant 0 : i32
    return %c0_i32, %c0_i32_0, %c0_i32_1 : i32, i32, i32
  }
  func.func @transform_8(%arg0: i32) -> (i32, i32) {
    %c0_i32 = arith.constant 0 : i32
    %c0_i32_0 = arith.constant 0 : i32
    %c0_i32_1 = arith.constant 0 : i32
    return %c0_i32, %c0_i32_0 : i32, i32
  }
  func.func @transform_9(%arg0: i32) -> (i32, i32) {
    %c0_i32 = arith.constant 0 : i32
    %c0_i32_0 = arith.constant 0 : i32
    %c0_i32_1 = arith.constant 0 : i32
    return %c0_i32, %c0_i32_0 : i32, i32
  }
  func.func @transform_10(%arg0: i32) -> (i32, i32, i32) {
    %c0_i32 = arith.constant 0 : i32
    %c0_i32_0 = arith.constant 0 : i32
    %c0_i32_1 = arith.constant 0 : i32
    %c0_i32_2 = arith.constant 0 : i32
    return %c0_i32, %c0_i32_0, %c0_i32_1 : i32, i32, i32
  }
  func.func @transform_11(%arg0: i32) -> (i32, i32) {
    %c0_i32 = arith.constant 0 : i32
    %c0_i32_0 = arith.constant 0 : i32
    %c0_i32_1 = arith.constant 0 : i32
    return %c0_i32, %c0_i32_0 : i32, i32
  }
  func.func @transform_12(%arg0: i32) -> (i32, i32) {
    %c0_i32 = arith.constant 0 : i32
    %c0_i32_0 = arith.constant 0 : i32
    %c0_i32_1 = arith.constant 0 : i32
    return %c0_i32, %c0_i32_0 : i32, i32
  }
  func.func @transform_13(%arg0: i32) -> (i32, i32, i32) {
    %c0_i32 = arith.constant 0 : i32
    %c0_i32_0 = arith.constant 0 : i32
    %c0_i32_1 = arith.constant 0 : i32
    %c0_i32_2 = arith.constant 0 : i32
    return %c0_i32, %c0_i32_0, %c0_i32_1 : i32, i32, i32
  }
  func.func @transform_14(%arg0: i32) -> (i32, i32) {
    %c0_i32 = arith.constant 0 : i32
    %c0_i32_0 = arith.constant 0 : i32
    %c0_i32_1 = arith.constant 0 : i32
    return %c0_i32, %c0_i32_0 : i32, i32
  }
  func.func @transform_15(%arg0: i32) -> (i32, i32) {
    %c0_i32 = arith.constant 0 : i32
    %c0_i32_0 = arith.constant 0 : i32
    %c0_i32_1 = arith.constant 0 : i32
    return %c0_i32, %c0_i32_0 : i32, i32
  }
  func.func @transform_16(%arg0: i32) -> (i32, i32) {
    %c0_i32 = arith.constant 0 : i32
    %c0_i32_0 = arith.constant 0 : i32
    %c0_i32_1 = arith.constant 0 : i32
    return %c0_i32, %c0_i32_0 : i32, i32
  }
  func.func @transform_17(%arg0: i32) -> (i32, i32) {
    %c0_i32 = arith.constant 0 : i32
    %c0_i32_0 = arith.constant 0 : i32
    %c0_i32_1 = arith.constant 0 : i32
    return %c0_i32, %c0_i32_0 : i32, i32
  }
  func.func @transform_18(%arg0: i32) -> (i32, i32, i32) {
    %c0_i32 = arith.constant 0 : i32
    %c0_i32_0 = arith.constant 0 : i32
    %c0_i32_1 = arith.constant 0 : i32
    return %arg0, %c0_i32, %c0_i32_0 : i32, i32, i32
  }
}

</mosaic_0001>

<llo_original>
// kernel: tpu_custom_call.1
$region0: #{tpu_custom_call.1}
  #allocation0 [shape = 'u32[]', space=smem, size = 0x4, offset = 0x4, fixed_abs, tag = 'smem constant byte address 0x4 - core index']
  #allocation1 [shape = 'u32[144,128]{1,0:T(1,128)}', space=vmem, size = 0x12000, scoped, tag = 'internal scratch']
  %s0 = inlined_call_operand.hbm [shape: bf16[2,16,128], index: 0, kind: input, shape index: {}]
  %s1 = inlined_call_operand.hbm [shape: bf16[3,128,128], index: 1, kind: input, shape index: {}]
  %s2 = inlined_call_operand.vmem [shape: f32[1,128], index: 2, kind: input, shape index: {}]
  %s3 = inlined_call_operand.vmem [shape: f32[1,128], index: 3, kind: input, shape index: {}]
  %s4 = inlined_call_operand.hbm [shape: bf16[3,128,128], index: 4, kind: input, shape index: {}]
  %s5 = inlined_call_operand.vmem [shape: f32[1,128], index: 5, kind: input, shape index: {}]
  %s6 = inlined_call_operand.vmem [shape: f32[1,128], index: 6, kind: input, shape index: {}]
  %s7 = inlined_call_operand.hbm [shape: bf16[3,128,128], index: 7, kind: input, shape index: {}]
  %s8 = inlined_call_operand.vmem [shape: f32[1,128], index: 8, kind: input, shape index: {}]
  %s9 = inlined_call_operand.vmem [shape: f32[1,128], index: 9, kind: input, shape index: {}]
  %s10 = inlined_call_operand.hbm [shape: bf16[3,128,128], index: 10, kind: input, shape index: {}]
  %s11 = inlined_call_operand.vmem [shape: f32[1,128], index: 11, kind: input, shape index: {}]
  %s12 = inlined_call_operand.vmem [shape: f32[1,128], index: 12, kind: input, shape index: {}]
  %s13 = inlined_call_operand.hbm [shape: bf16[3,128,128], index: 13, kind: input, shape index: {}]
  %s14 = inlined_call_operand.vmem [shape: f32[1,128], index: 14, kind: input, shape index: {}]
  %s15 = inlined_call_operand.vmem [shape: f32[1,128], index: 15, kind: input, shape index: {}]
  %s16 = inlined_call_operand.vmem [shape: f32[8,128], index: 16, kind: input, shape index: {}]
  %s17 = inlined_call_operand.vmem [shape: f32[8,1], index: 17, kind: input, shape index: {}]
  %s18 = inlined_call_operand.vmem [shape: f32[2,8,1], index: 18, kind: output, shape index: {}]
  %s19 = sld [smem:[#allocation0]]
  $region129: #{tpu_custom_call.1} parent=0
    _
  %s21 = ssub.s32 1, %s19
  %s22 = scalar_select 0, %s21, %s19
  $region1: #{tpu_custom_call.1} parent=0
    #allocation2 [shape = 'u8[8192]{0}', space=vmem, size = 0x2000, scoped, tag = 'input window, operand 0']
    #allocation3 [shape = 's32[2]{0}', space=sflag, size = 0x8, scoped, tag = 'scoped memory for tpu_custom_call.1']
    #allocation4 [shape = 'u8[98304]{0}', space=vmem, size = 0x18000, scoped, tag = 'input window, operand 1, single buffered']
    #allocation5 [shape = 's32[1]{0}', space=sflag, size = 0x4, scoped, tag = 'scoped memory for tpu_custom_call.1']
    #allocation6 [shape = 'u8[98304]{0}', space=vmem, size = 0x18000, scoped, tag = 'input window, operand 4, single buffered']
    #allocation7 [shape = 'u8[98304]{0}', space=vmem, size = 0x18000, scoped, tag = 'input window, operand 7, single buffered']
    #allocation8 [shape = 's32[1]{0}', space=sflag, size = 0x4, scoped, tag = 'scoped memory for tpu_custom_call.1']
    #allocation9 [shape = 'u8[98304]{0}', space=vmem, size = 0x18000, scoped, tag = 'input window, operand 10, single buffered']
    #allocation10 [shape = 'u8[98304]{0}', space=vmem, size = 0x18000, scoped, tag = 'input window, operand 13, single buffered']
    #allocation11 [shape = 's32[1]{0}', space=sflag, size = 0x4, scoped, tag = 'scoped memory for tpu_custom_call.1']
    %23 = vsyncpa [#allocation3], 0
    %s24 = scalar_lea.sflag [#allocation3], 1
    %25 = vsyncpa %s24, 0
    %26 = vsyncpa [#allocation5], 0
    %27 = vsyncpa [#allocation8], 0
    %28 = vsyncpa [#allocation11], 0
    loop: start=0, step=1, limit=4
    $region2: #{tpu_custom_call.1} parent=1 // loop_pre_header
      _
    $region3: #{tpu_custom_call.1} parent=1 // loop_header
      %s30 = sphi 0, %s34
      %p31 = scmp.ge.s32.totalorder %s30, 4
      %s40 = sphi 0, %s42
      %s43 = sphi 0, %s40
      %s44 = sphi 0, %s43
      %s60 = sphi 0, %s44
      %s64 = sphi 0, %s64
      %s66 = sphi 0, %s64
      %s67 = sphi 0, %s66
      %s81 = sphi 0, %s67
      %s85 = sphi 0, %s85
      %s87 = sphi 0, %s85
      %s88 = sphi 0, %s87
      %s102 = sphi 0, %s88
      %s106 = sphi 0, %s106
      %s108 = sphi 0, %s106
      %s109 = sphi 0, %s108
      %s123 = sphi 0, %s109
      %s127 = sphi 0, %s127
      %s129 = sphi 0, %s127
      %s130 = sphi 0, %s129
      %s144 = sphi 0, %s130
      %s148 = sphi 0, %s148
      %s150 = sphi 0, %s148
      %s151 = sphi 0, %s150
      %s165 = sphi 0, %s151
      %s169 = sphi 0, %s169
      %s171 = sphi 0, %s169
      %s172 = sphi 0, %s171
      %s186 = sphi 0, %s172
      %s190 = sphi 0, %s190
      %s192 = sphi 0, %s190
      %s193 = sphi 0, %s192
      %s207 = sphi 0, %s193
      %s211 = sphi 0, %s211
      %s213 = sphi 0, %s211
      %s214 = sphi 0, %s213
      %s228 = sphi 0, %s214
      %s232 = sphi 0, %s232
      %s234 = sphi 0, %s232
      %s235 = sphi 0, %s234
      %s249 = sphi 0, %s235
      %s253 = sphi 0, %s253
      %s255 = sphi 0, %s253
      %s256 = sphi 0, %s255
      %s270 = sphi 0, %s256
      %s274 = sphi 0, %s274
      %s276 = sphi 0, %s274
      %s277 = sphi 0, %s276
      %s291 = sphi 0, %s277
      %s295 = sphi 0, %s295
      %s297 = sphi 0, %s295
      %s298 = sphi 0, %s297
      %s312 = sphi 0, %s298
      %s316 = sphi 0, %s316
      %s318 = sphi 0, %s316
      %s319 = sphi 0, %s318
      %s333 = sphi 0, %s319
      %s337 = sphi 0, %s337
      %s339 = sphi 0, %s337
      %s340 = sphi 0, %s339
      %s354 = sphi 0, %s340
      %s358 = sphi 0, %s358
      %s360 = sphi 0, %s358
      %s361 = sphi 0, %s360
      %s375 = sphi 0, %s361
      %s379 = sphi 0, %s379
      %s381 = sphi 0, %s379
      %s382 = sphi 0, %s381
      %s396 = sphi 0, %s382
      %s400 = sphi 0, %s400
      %s402 = sphi 0, %s400
      %s403 = sphi 0, %s402
      %s417 = sphi 0, %s403
      %s423 = sphi 0, %s425
      %s426 = sphi 0, %s423
      %s427 = sphi 0, %s426
      %s443 = sphi 0, %s427
    $region4: #{tpu_custom_call.1} parent=1 // loop_header_branch
      %33 = sbr.rel (%p31) target = $region8
    $region5: #{tpu_custom_call.1} parent=1 // loop_body
      %s35 = ssub.s32 %s30, 1
      %s36 = ssub.s32 %s30, 2
      %s37 = sadd.s32 %s30, 1
      %s38 = ssub.s32 %s30, %s37
      %p39 = scmp.eq.s32.totalorder %s38, 0
      %s41 = sadd.s32 %s40, 1
      %s42 = scalar_select %p39, %s40, %s41
      %p45 = pneg %p39
      %p46 = scmp.eq.s32.totalorder %s30, 1
      %p47 = por %p45, %p46
      %p48 = scmp.ne.s32.totalorder %s40, %s43
      %p49 = scmp.eq.s32.totalorder %s30, 0
      %p50 = por %p48, %p49
      %p51 = scmp.ne.s32.totalorder %s40, %s43
      %p52 = scmp.eq.s32.totalorder %s35, 1
      %p53 = por %p51, %p52
      %p54 = scmp.ne.s32.totalorder %s43, %s44
      %p55 = scmp.eq.s32.totalorder %s35, 0
      %p56 = por %p54, %p55
      %p57 = scmp.ne.s32.totalorder %s43, %s44
      %p58 = scmp.eq.s32.totalorder %s36, 1
      %p59 = por %p57, %p58
      %p61 = scmp.ne.s32.totalorder %s44, %s60
      %p62 = scmp.eq.s32.totalorder %s36, 0
      %p63 = por %p61, %p62
      %s65 = sadd.s32 %s64, 1
      %p68 = scmp.eq.s32.totalorder %s30, 1
      %p69 = scmp.ne.s32.totalorder %s64, %s66
      %p70 = scmp.eq.s32.totalorder %s30, 0
      %p71 = por %p69, %p70
      %p72 = scmp.ne.s32.totalorder %s64, %s66
      %p73 = scmp.eq.s32.totalorder %s35, 1
      %p74 = por %p72, %p73
      %p75 = scmp.ne.s32.totalorder %s66, %s67
      %p76 = scmp.eq.s32.totalorder %s35, 0
      %p77 = por %p75, %p76
      %p78 = scmp.ne.s32.totalorder %s66, %s67
      %p79 = scmp.eq.s32.totalorder %s36, 1
      %p80 = por %p78, %p79
      %p82 = scmp.ne.s32.totalorder %s67, %s81
      %p83 = scmp.eq.s32.totalorder %s36, 0
      %p84 = por %p82, %p83
      %s86 = sadd.s32 %s85, 1
      %p89 = scmp.eq.s32.totalorder %s30, 1
      %p90 = scmp.ne.s32.totalorder %s85, %s87
      %p91 = scmp.eq.s32.totalorder %s30, 0
      %p92 = por %p90, %p91
      %p93 = scmp.ne.s32.totalorder %s85, %s87
      %p94 = scmp.eq.s32.totalorder %s35, 1
      %p95 = por %p93, %p94
      %p96 = scmp.ne.s32.totalorder %s87, %s88
      %p97 = scmp.eq.s32.totalorder %s35, 0
      %p98 = por %p96, %p97
      %p99 = scmp.ne.s32.totalorder %s87, %s88
      %p100 = scmp.eq.s32.totalorder %s36, 1
      %p101 = por %p99, %p100
      %p103 = scmp.ne.s32.totalorder %s88, %s102
      %p104 = scmp.eq.s32.totalorder %s36, 0
      %p105 = por %p103, %p104
      %s107 = sadd.s32 %s106, 1
      %p110 = scmp.eq.s32.totalorder %s30, 1
      %p111 = scmp.ne.s32.totalorder %s106, %s108
      %p112 = scmp.eq.s32.totalorder %s30, 0
      %p113 = por %p111, %p112
      %p114 = scmp.ne.s32.totalorder %s106, %s108
      %p115 = scmp.eq.s32.totalorder %s35, 1
      %p116 = por %p114, %p115
      %p117 = scmp.ne.s32.totalorder %s108, %s109
      %p118 = scmp.eq.s32.totalorder %s35, 0
      %p119 = por %p117, %p118
      %p120 = scmp.ne.s32.totalorder %s108, %s109
      %p121 = scmp.eq.s32.totalorder %s36, 1
      %p122 = por %p120, %p121
      %p124 = scmp.ne.s32.totalorder %s109, %s123
      %p125 = scmp.eq.s32.totalorder %s36, 0
      %p126 = por %p124, %p125
      %s128 = sadd.s32 %s127, 1
      %p131 = scmp.eq.s32.totalorder %s30, 1
      %p132 = scmp.ne.s32.totalorder %s127, %s129
      %p133 = scmp.eq.s32.totalorder %s30, 0
      %p134 = por %p132, %p133
      %p135 = scmp.ne.s32.totalorder %s127, %s129
      %p136 = scmp.eq.s32.totalorder %s35, 1
      %p137 = por %p135, %p136
      %p138 = scmp.ne.s32.totalorder %s129, %s130
      %p139 = scmp.eq.s32.totalorder %s35, 0
      %p140 = por %p138, %p139
      %p141 = scmp.ne.s32.totalorder %s129, %s130
      %p142 = scmp.eq.s32.totalorder %s36, 1
      %p143 = por %p141, %p142
      %p145 = scmp.ne.s32.totalorder %s130, %s144
      %p146 = scmp.eq.s32.totalorder %s36, 0
      %p147 = por %p145, %p146
      %s149 = sadd.s32 %s148, 1
      %p152 = scmp.eq.s32.totalorder %s30, 1
      %p153 = scmp.ne.s32.totalorder %s148, %s150
      %p154 = scmp.eq.s32.totalorder %s30, 0
      %p155 = por %p153, %p154
      %p156 = scmp.ne.s32.totalorder %s148, %s150
      %p157 = scmp.eq.s32.totalorder %s35, 1
      %p158 = por %p156, %p157
      %p159 = scmp.ne.s32.totalorder %s150, %s151
      %p160 = scmp.eq.s32.totalorder %s35, 0
      %p161 = por %p159, %p160
      %p162 = scmp.ne.s32.totalorder %s150, %s151
      %p163 = scmp.eq.s32.totalorder %s36, 1
      %p164 = por %p162, %p163
      %p166 = scmp.ne.s32.totalorder %s151, %s165
      %p167 = scmp.eq.s32.totalorder %s36, 0
      %p168 = por %p166, %p167
      %s170 = sadd.s32 %s169, 1
      %p173 = scmp.eq.s32.totalorder %s30, 1
      %p174 = scmp.ne.s32.totalorder %s169, %s171
      %p175 = scmp.eq.s32.totalorder %s30, 0
      %p176 = por %p174, %p175
      %p177 = scmp.ne.s32.totalorder %s169, %s171
      %p178 = scmp.eq.s32.totalorder %s35, 1
      %p179 = por %p177, %p178
      %p180 = scmp.ne.s32.totalorder %s171, %s172
      %p181 = scmp.eq.s32.totalorder %s35, 0
      %p182 = por %p180, %p181
      %p183 = scmp.ne.s32.totalorder %s171, %s172
      %p184 = scmp.eq.s32.totalorder %s36, 1
      %p185 = por %p183, %p184
      %p187 = scmp.ne.s32.totalorder %s172, %s186
      %p188 = scmp.eq.s32.totalorder %s36, 0
      %p189 = por %p187, %p188
      %s191 = sadd.s32 %s190, 1
      %p194 = scmp.eq.s32.totalorder %s30, 1
      %p195 = scmp.ne.s32.totalorder %s190, %s192
      %p196 = scmp.eq.s32.totalorder %s30, 0
      %p197 = por %p195, %p196
      %p198 = scmp.ne.s32.totalorder %s190, %s192
      %p199 = scmp.eq.s32.totalorder %s35, 1
      %p200 = por %p198, %p199
      %p201 = scmp.ne.s32.totalorder %s192, %s193
      %p202 = scmp.eq.s32.totalorder %s35, 0
      %p203 = por %p201, %p202
      %p204 = scmp.ne.s32.totalorder %s192, %s193
      %p205 = scmp.eq.s32.totalorder %s36, 1
      %p206 = por %p204, %p205
      %p208 = scmp.ne.s32.totalorder %s193, %s207
      %p209 = scmp.eq.s32.totalorder %s36, 0
      %p210 = por %p208, %p209
      %s212 = sadd.s32 %s211, 1
      %p215 = scmp.eq.s32.totalorder %s30, 1
      %p216 = scmp.ne.s32.totalorder %s211, %s213
      %p217 = scmp.eq.s32.totalorder %s30, 0
      %p218 = por %p216, %p217
      %p219 = scmp.ne.s32.totalorder %s211, %s213
      %p220 = scmp.eq.s32.totalorder %s35, 1
      %p221 = por %p219, %p220
      %p222 = scmp.ne.s32.totalorder %s213, %s214
      %p223 = scmp.eq.s32.totalorder %s35, 0
      %p224 = por %p222, %p223
      %p225 = scmp.ne.s32.totalorder %s213, %s214
      %p226 = scmp.eq.s32.totalorder %s36, 1
      %p227 = por %p225, %p226
      %p229 = scmp.ne.s32.totalorder %s214, %s228
      %p230 = scmp.eq.s32.totalorder %s36, 0
      %p231 = por %p229, %p230
      %s233 = sadd.s32 %s232, 1
      %p236 = scmp.eq.s32.totalorder %s30, 1
      %p237 = scmp.ne.s32.totalorder %s232, %s234
      %p238 = scmp.eq.s32.totalorder %s30, 0
      %p239 = por %p237, %p238
      %p240 = scmp.ne.s32.totalorder %s232, %s234
      %p241 = scmp.eq.s32.totalorder %s35, 1
      %p242 = por %p240, %p241
      %p243 = scmp.ne.s32.totalorder %s234, %s235
      %p244 = scmp.eq.s32.totalorder %s35, 0
      %p245 = por %p243, %p244
      %p246 = scmp.ne.s32.totalorder %s234, %s235
      %p247 = scmp.eq.s32.totalorder %s36, 1
      %p248 = por %p246, %p247
      %p250 = scmp.ne.s32.totalorder %s235, %s249
      %p251 = scmp.eq.s32.totalorder %s36, 0
      %p252 = por %p250, %p251
      %s254 = sadd.s32 %s253, 1
      %p257 = scmp.eq.s32.totalorder %s30, 1
      %p258 = scmp.ne.s32.totalorder %s253, %s255
      %p259 = scmp.eq.s32.totalorder %s30, 0
      %p260 = por %p258, %p259
      %p261 = scmp.ne.s32.totalorder %s253, %s255
      %p262 = scmp.eq.s32.totalorder %s35, 1
      %p263 = por %p261, %p262
      %p264 = scmp.ne.s32.totalorder %s255, %s256
      %p265 = scmp.eq.s32.totalorder %s35, 0
      %p266 = por %p264, %p265
      %p267 = scmp.ne.s32.totalorder %s255, %s256
      %p268 = scmp.eq.s32.totalorder %s36, 1
      %p269 = por %p267, %p268
      %p271 = scmp.ne.s32.totalorder %s256, %s270
      %p272 = scmp.eq.s32.totalorder %s36, 0
      %p273 = por %p271, %p272
      %s275 = sadd.s32 %s274, 1
      %p278 = scmp.eq.s32.totalorder %s30, 1
      %p279 = scmp.ne.s32.totalorder %s274, %s276
      %p280 = scmp.eq.s32.totalorder %s30, 0
      %p281 = por %p279, %p280
      %p282 = scmp.ne.s32.totalorder %s274, %s276
      %p283 = scmp.eq.s32.totalorder %s35, 1
      %p284 = por %p282, %p283
      %p285 = scmp.ne.s32.totalorder %s276, %s277
      %p286 = scmp.eq.s32.totalorder %s35, 0
      %p287 = por %p285, %p286
      %p288 = scmp.ne.s32.totalorder %s276, %s277
      %p289 = scmp.eq.s32.totalorder %s36, 1
      %p290 = por %p288, %p289
      %p292 = scmp.ne.s32.totalorder %s277, %s291
      %p293 = scmp.eq.s32.totalorder %s36, 0
      %p294 = por %p292, %p293
      %s296 = sadd.s32 %s295, 1
      %p299 = scmp.eq.s32.totalorder %s30, 1
      %p300 = scmp.ne.s32.totalorder %s295, %s297
      %p301 = scmp.eq.s32.totalorder %s30, 0
      %p302 = por %p300, %p301
      %p303 = scmp.ne.s32.totalorder %s295, %s297
      %p304 = scmp.eq.s32.totalorder %s35, 1
      %p305 = por %p303, %p304
      %p306 = scmp.ne.s32.totalorder %s297, %s298
      %p307 = scmp.eq.s32.totalorder %s35, 0
      %p308 = por %p306, %p307
      %p309 = scmp.ne.s32.totalorder %s297, %s298
      %p310 = scmp.eq.s32.totalorder %s36, 1
      %p311 = por %p309, %p310
      %p313 = scmp.ne.s32.totalorder %s298, %s312
      %p314 = scmp.eq.s32.totalorder %s36, 0
      %p315 = por %p313, %p314
      %s317 = sadd.s32 %s316, 1
      %p320 = scmp.eq.s32.totalorder %s30, 1
      %p321 = scmp.ne.s32.totalorder %s316, %s318
      %p322 = scmp.eq.s32.totalorder %s30, 0
      %p323 = por %p321, %p322
      %p324 = scmp.ne.s32.totalorder %s316, %s318
      %p325 = scmp.eq.s32.totalorder %s35, 1
      %p326 = por %p324, %p325
      %p327 = scmp.ne.s32.totalorder %s318, %s319
      %p328 = scmp.eq.s32.totalorder %s35, 0
      %p329 = por %p327, %p328
      %p330 = scmp.ne.s32.totalorder %s318, %s319
      %p331 = scmp.eq.s32.totalorder %s36, 1
      %p332 = por %p330, %p331
      %p334 = scmp.ne.s32.totalorder %s319, %s333
      %p335 = scmp.eq.s32.totalorder %s36, 0
      %p336 = por %p334, %p335
      %s338 = sadd.s32 %s337, 1
      %p341 = scmp.eq.s32.totalorder %s30, 1
      %p342 = scmp.ne.s32.totalorder %s337, %s339
      %p343 = scmp.eq.s32.totalorder %s30, 0
      %p344 = por %p342, %p343
      %p345 = scmp.ne.s32.totalorder %s337, %s339
      %p346 = scmp.eq.s32.totalorder %s35, 1
      %p347 = por %p345, %p346
      %p348 = scmp.ne.s32.totalorder %s339, %s340
      %p349 = scmp.eq.s32.totalorder %s35, 0
      %p350 = por %p348, %p349
      %p351 = scmp.ne.s32.totalorder %s339, %s340
      %p352 = scmp.eq.s32.totalorder %s36, 1
      %p353 = por %p351, %p352
      %p355 = scmp.ne.s32.totalorder %s340, %s354
      %p356 = scmp.eq.s32.totalorder %s36, 0
      %p357 = por %p355, %p356
      %s359 = sadd.s32 %s358, 1
      %p362 = scmp.eq.s32.totalorder %s30, 1
      %p363 = scmp.ne.s32.totalorder %s358, %s360
      %p364 = scmp.eq.s32.totalorder %s30, 0
      %p365 = por %p363, %p364
      %p366 = scmp.ne.s32.totalorder %s358, %s360
      %p367 = scmp.eq.s32.totalorder %s35, 1
      %p368 = por %p366, %p367
      %p369 = scmp.ne.s32.totalorder %s360, %s361
      %p370 = scmp.eq.s32.totalorder %s35, 0
      %p371 = por %p369, %p370
      %p372 = scmp.ne.s32.totalorder %s360, %s361
      %p373 = scmp.eq.s32.totalorder %s36, 1
      %p374 = por %p372, %p373
      %p376 = scmp.ne.s32.totalorder %s361, %s375
      %p377 = scmp.eq.s32.totalorder %s36, 0
      %p378 = por %p376, %p377
      %s380 = sadd.s32 %s379, 1
      %p383 = scmp.eq.s32.totalorder %s30, 1
      %p384 = scmp.ne.s32.totalorder %s379, %s381
      %p385 = scmp.eq.s32.totalorder %s30, 0
      %p386 = por %p384, %p385
      %p387 = scmp.ne.s32.totalorder %s379, %s381
      %p388 = scmp.eq.s32.totalorder %s35, 1
      %p389 = por %p387, %p388
      %p390 = scmp.ne.s32.totalorder %s381, %s382
      %p391 = scmp.eq.s32.totalorder %s35, 0
      %p392 = por %p390, %p391
      %p393 = scmp.ne.s32.totalorder %s381, %s382
      %p394 = scmp.eq.s32.totalorder %s36, 1
      %p395 = por %p393, %p394
      %p397 = scmp.ne.s32.totalorder %s382, %s396
      %p398 = scmp.eq.s32.totalorder %s36, 0
      %p399 = por %p397, %p398
      %s401 = sadd.s32 %s400, 1
      %p404 = scmp.eq.s32.totalorder %s30, 1
      %p405 = scmp.ne.s32.totalorder %s400, %s402
      %p406 = scmp.eq.s32.totalorder %s30, 0
      %p407 = por %p405, %p406
      %p408 = scmp.ne.s32.totalorder %s400, %s402
      %p409 = scmp.eq.s32.totalorder %s35, 1
      %p410 = por %p408, %p409
      %p411 = scmp.ne.s32.totalorder %s402, %s403
      %p412 = scmp.eq.s32.totalorder %s35, 0
      %p413 = por %p411, %p412
      %p414 = scmp.ne.s32.totalorder %s402, %s403
      %p415 = scmp.eq.s32.totalorder %s36, 1
      %p416 = por %p414, %p415
      %p418 = scmp.ne.s32.totalorder %s403, %s417
      %p419 = scmp.eq.s32.totalorder %s36, 0
      %p420 = por %p418, %p419
      %s421 = ssub.s32 %s30, %s37
      %p422 = scmp.eq.s32.totalorder %s421, 0
      %s424 = sadd.s32 %s423, 1
      %s425 = scalar_select %p422, %s423, %s424
      %p428 = pneg %p422
      %p429 = scmp.eq.s32.totalorder %s30, 1
      %p430 = por %p428, %p429
      %p431 = scmp.ne.s32.totalorder %s423, %s426
      %p432 = scmp.eq.s32.totalorder %s30, 0
      %p433 = por %p431, %p432
      %p434 = scmp.ne.s32.totalorder %s423, %s426
      %p435 = scmp.eq.s32.totalorder %s35, 1
      %p436 = por %p434, %p435
      %p437 = scmp.ne.s32.totalorder %s426, %s427
      %p438 = scmp.eq.s32.totalorder %s35, 0
      %p439 = por %p437, %p438
      %p440 = scmp.ne.s32.totalorder %s426, %s427
      %p441 = scmp.eq.s32.totalorder %s36, 1
      %p442 = por %p440, %p441
      %p444 = scmp.ne.s32.totalorder %s427, %s443
      %p445 = scmp.eq.s32.totalorder %s36, 0
      %p446 = por %p444, %p445
      %p447 = scmp.le.s32.totalorder 1, %s30
      %p448 = scmp.lt.s32.totalorder %s30, 3
      %p449 = pnand %p447, %p448
      %p450 = pneg %p449
      // Predicated region
      $region9: #{tpu_custom_call.1} parent=5 // pred_check
        _
      $region10: #{tpu_custom_call.1} parent=5 // pred_check_branch
        %452 = sbr.rel (%p449) target = $region12
      $region11: #{tpu_custom_call.1} parent=5 // pred_region
        %s453 = ssub.s32 %s30, 1
        // Predicated region
        $region13: #{tpu_custom_call.1} parent=11 // pred_check
          %p454 = pneg %p77
        $region14: #{tpu_custom_call.1} parent=11 // pred_check_branch
          %456 = sbr.rel (%p454) target = $region16
        $region15: #{tpu_custom_call.1} parent=11 // pred_region
          %s458 = ssub.s32 3072, 3072
          %459 = vsyncadd [#allocation5], %s458
          %s460 = sshll.u32 [#allocation4], 4
          %s461 = int_to_ptr.vmem [resolvable:$true] %s460
          %466 = dma.hbm_to_vmem [thread:$0]  %s1, 3072, %s461, [#allocation5], 64, 64, 4
        $region16: #{tpu_custom_call.1} parent=11 // pred_fallthru
          _
        // Predicated region
        $region17: #{tpu_custom_call.1} parent=11 // pred_check
          %p467 = pneg %p98
        $region18: #{tpu_custom_call.1} parent=11 // pred_check_branch
          %469 = sbr.rel (%p467) target = $region20
        $region19: #{tpu_custom_call.1} parent=11 // pred_region
          _
        $region20: #{tpu_custom_call.1} parent=11 // pred_fallthru
          _
        // Predicated region
        $region21: #{tpu_custom_call.1} parent=11 // pred_check
          %p470 = pneg %p119
        $region22: #{tpu_custom_call.1} parent=11 // pred_check_branch
          %472 = sbr.rel (%p470) target = $region24
        $region23: #{tpu_custom_call.1} parent=11 // pred_region
          _
        $region24: #{tpu_custom_call.1} parent=11 // pred_fallthru
          _
        // Predicated region
        $region25: #{tpu_custom_call.1} parent=11 // pred_check
          %p473 = pneg %p140
        $region26: #{tpu_custom_call.1} parent=11 // pred_check_branch
          %475 = sbr.rel (%p473) target = $region28
        $region27: #{tpu_custom_call.1} parent=11 // pred_region
          %s477 = ssub.s32 3072, 3072
          %478 = vsyncadd [#allocation5], %s477
          %s479 = sshll.u32 [#allocation6], 4
          %s480 = int_to_ptr.vmem [resolvable:$true] %s479
          %485 = dma.hbm_to_vmem [thread:$0]  %s4, 3072, %s480, [#allocation5], 64, 64, 4
        $region28: #{tpu_custom_call.1} parent=11 // pred_fallthru
          _
        // Predicated region
        $region29: #{tpu_custom_call.1} parent=11 // pred_check
          %p486 = pneg %p161
        $region30: #{tpu_custom_call.1} parent=11 // pred_check_branch
          %488 = sbr.rel (%p486) target = $region32
        $region31: #{tpu_custom_call.1} parent=11 // pred_region
          _
        $region32: #{tpu_custom_call.1} parent=11 // pred_fallthru
          _
        // Predicated region
        $region33: #{tpu_custom_call.1} parent=11 // pred_check
          %p489 = pneg %p182
        $region34: #{tpu_custom_call.1} parent=11 // pred_check_branch
          %491 = sbr.rel (%p489) target = $region36
        $region35: #{tpu_custom_call.1} parent=11 // pred_region
          _
        $region36: #{tpu_custom_call.1} parent=11 // pred_fallthru
          _
        // Predicated region
        $region37: #{tpu_custom_call.1} parent=11 // pred_check
          %p492 = pneg %p203
        $region38: #{tpu_custom_call.1} parent=11 // pred_check_branch
          %494 = sbr.rel (%p492) target = $region40
        $region39: #{tpu_custom_call.1} parent=11 // pred_region
          %s496 = ssub.s32 3072, 3072
          %497 = vsyncadd [#allocation8], %s496
          %s498 = sshll.u32 [#allocation7], 4
          %s499 = int_to_ptr.vmem [resolvable:$true] %s498
          %504 = dma.hbm_to_vmem [thread:$0]  %s7, 3072, %s499, [#allocation8], 64, 64, 4
        $region40: #{tpu_custom_call.1} parent=11 // pred_fallthru
          _
        // Predicated region
        $region41: #{tpu_custom_call.1} parent=11 // pred_check
          %p505 = pneg %p224
        $region42: #{tpu_custom_call.1} parent=11 // pred_check_branch
          %507 = sbr.rel (%p505) target = $region44
        $region43: #{tpu_custom_call.1} parent=11 // pred_region
          _
        $region44: #{tpu_custom_call.1} parent=11 // pred_fallthru
          _
        // Predicated region
        $region45: #{tpu_custom_call.1} parent=11 // pred_check
          %p508 = pneg %p245
        $region46: #{tpu_custom_call.1} parent=11 // pred_check_branch
          %510 = sbr.rel (%p508) target = $region48
        $region47: #{tpu_custom_call.1} parent=11 // pred_region
          _
        $region48: #{tpu_custom_call.1} parent=11 // pred_fallthru
          _
        // Predicated region
        $region49: #{tpu_custom_call.1} parent=11 // pred_check
          %p511 = pneg %p266
        $region50: #{tpu_custom_call.1} parent=11 // pred_check_branch
          %513 = sbr.rel (%p511) target = $region52
        $region51: #{tpu_custom_call.1} parent=11 // pred_region
          %s515 = ssub.s32 3072, 3072
          %516 = vsyncadd [#allocation8], %s515
          %s517 = sshll.u32 [#allocation9], 4
          %s518 = int_to_ptr.vmem [resolvable:$true] %s517
          %523 = dma.hbm_to_vmem [thread:$0]  %s10, 3072, %s518, [#allocation8], 64, 64, 4
        $region52: #{tpu_custom_call.1} parent=11 // pred_fallthru
          _
        // Predicated region
        $region53: #{tpu_custom_call.1} parent=11 // pred_check
          %p524 = pneg %p287
        $region54: #{tpu_custom_call.1} parent=11 // pred_check_branch
          %526 = sbr.rel (%p524) target = $region56
        $region55: #{tpu_custom_call.1} parent=11 // pred_region
          _
        $region56: #{tpu_custom_call.1} parent=11 // pred_fallthru
          _
        // Predicated region
        $region57: #{tpu_custom_call.1} parent=11 // pred_check
          %p527 = pneg %p308
        $region58: #{tpu_custom_call.1} parent=11 // pred_check_branch
          %529 = sbr.rel (%p527) target = $region60
        $region59: #{tpu_custom_call.1} parent=11 // pred_region
          _
        $region60: #{tpu_custom_call.1} parent=11 // pred_fallthru
          _
        // Predicated region
        $region61: #{tpu_custom_call.1} parent=11 // pred_check
          %p530 = pneg %p329
        $region62: #{tpu_custom_call.1} parent=11 // pred_check_branch
          %532 = sbr.rel (%p530) target = $region64
        $region63: #{tpu_custom_call.1} parent=11 // pred_region
          %s534 = ssub.s32 3072, 3072
          %535 = vsyncadd [#allocation11], %s534
          %s536 = sshll.u32 [#allocation10], 4
          %s537 = int_to_ptr.vmem [resolvable:$true] %s536
          %542 = dma.hbm_to_vmem [thread:$0]  %s13, 3072, %s537, [#allocation11], 64, 64, 4
        $region64: #{tpu_custom_call.1} parent=11 // pred_fallthru
          _
        // Predicated region
        $region65: #{tpu_custom_call.1} parent=11 // pred_check
          %p543 = pneg %p350
        $region66: #{tpu_custom_call.1} parent=11 // pred_check_branch
          %545 = sbr.rel (%p543) target = $region68
        $region67: #{tpu_custom_call.1} parent=11 // pred_region
          _
        $region68: #{tpu_custom_call.1} parent=11 // pred_fallthru
          _
        // Predicated region
        $region69: #{tpu_custom_call.1} parent=11 // pred_check
          %p546 = pneg %p371
        $region70: #{tpu_custom_call.1} parent=11 // pred_check_branch
          %548 = sbr.rel (%p546) target = $region72
        $region71: #{tpu_custom_call.1} parent=11 // pred_region
          _
        $region72: #{tpu_custom_call.1} parent=11 // pred_fallthru
          _
        // Predicated region
        $region73: #{tpu_custom_call.1} parent=11 // pred_check
          %p549 = pneg %p392
        $region74: #{tpu_custom_call.1} parent=11 // pred_check_branch
          %551 = sbr.rel (%p549) target = $region76
        $region75: #{tpu_custom_call.1} parent=11 // pred_region
          _
        $region76: #{tpu_custom_call.1} parent=11 // pred_fallthru
          _
        // Predicated region
        $region77: #{tpu_custom_call.1} parent=11 // pred_check
          %p552 = pneg %p413
        $region78: #{tpu_custom_call.1} parent=11 // pred_check_branch
          %554 = sbr.rel (%p552) target = $region80
        $region79: #{tpu_custom_call.1} parent=11 // pred_region
          _
        $region80: #{tpu_custom_call.1} parent=11 // pred_fallthru
          _
      $region12: #{tpu_custom_call.1} parent=5 // pred_fallthru
        _
      %p555 = scmp.lt.s32.totalorder %s30, 2
      // Predicated region
      $region81: #{tpu_custom_call.1} parent=5 // pred_check
        %p556 = pneg %p555
      $region82: #{tpu_custom_call.1} parent=5 // pred_check_branch
        %558 = sbr.rel (%p556) target = $region84
      $region83: #{tpu_custom_call.1} parent=5 // pred_region
        // Predicated region
        $region85: #{tpu_custom_call.1} parent=83 // pred_check
          %p559 = pneg %p50
        $region86: #{tpu_custom_call.1} parent=83 // pred_check_branch
          %561 = sbr.rel (%p559) target = $region88
        $region87: #{tpu_custom_call.1} parent=83 // pred_region
          %s562 = sand.u32 %s40, 1
          %s563 = scalar_lea.sflag [#allocation3], %s562
          %s564 = sand.u32 %s40, 1
          %s565 = smul.addr %s564, 8
          %s566 = scalar_lea.vmem [#allocation2], %s565
          %s568 = ssub.s32 128, 128
          %569 = vsyncadd %s563, %s568
          %s570 = smul.addr %s30, 2
          %s571 = smul.addr %s570, 64
          %s572 = scalar_lea.hbm %s0, %s571
          %s573 = sshll.u32 %s566, 4
          %s574 = int_to_ptr.vmem [resolvable:$true] %s573
          %579 = dma.hbm_to_vmem [thread:$0]  %s572, 128, %s574, %s563, 64, 64, 4
        $region88: #{tpu_custom_call.1} parent=83 // pred_fallthru
          _
      $region84: #{tpu_custom_call.1} parent=5 // pred_fallthru
        _
      %p580 = scmp.le.s32.totalorder 1, %s30
      %p581 = scmp.lt.s32.totalorder %s30, 3
      %p582 = pnand %p580, %p581
      %p583 = pneg %p582
      // Predicated region
      $region89: #{tpu_custom_call.1} parent=5 // pred_check
        _
      $region90: #{tpu_custom_call.1} parent=5 // pred_check_branch
        %585 = sbr.rel (%p582) target = $region92
      $region91: #{tpu_custom_call.1} parent=5 // pred_region
        %s586 = ssub.s32 %s30, 1
        %s587 = sand.u32 %s43, 1
        %s588 = scalar_lea.sflag [#allocation3], %s587
        %s589 = sand.u32 %s43, 1
        %s590 = smul.addr %s589, 8
        %s591 = scalar_lea.vmem [#allocation2], %s590
        // Predicated region
        $region93: #{tpu_custom_call.1} parent=91 // pred_check
          %p592 = pneg %p56
        $region94: #{tpu_custom_call.1} parent=91 // pred_check_branch
          %594 = sbr.rel (%p592) target = $region96
        $region95: #{tpu_custom_call.1} parent=91 // pred_region
          %595 = dma.done %s588, 128
        $region96: #{tpu_custom_call.1} parent=91 // pred_fallthru
          _
        // Predicated region
        $region97: #{tpu_custom_call.1} parent=91 // pred_check
          %p596 = pneg %p77
        $region98: #{tpu_custom_call.1} parent=91 // pred_check_branch
          %598 = sbr.rel (%p596) target = $region100
        $region99: #{tpu_custom_call.1} parent=91 // pred_region
          %599 = dma.done [#allocation5], 3072
        $region100: #{tpu_custom_call.1} parent=91 // pred_fallthru
          _
        // Predicated region
        $region101: #{tpu_custom_call.1} parent=91 // pred_check
          %p600 = pneg %p140
        $region102: #{tpu_custom_call.1} parent=91 // pred_check_branch
          %602 = sbr.rel (%p600) target = $region104
        $region103: #{tpu_custom_call.1} parent=91 // pred_region
          %603 = dma.done [#allocation5], 3072
        $region104: #{tpu_custom_call.1} parent=91 // pred_fallthru
          _
        // Predicated region
        $region105: #{tpu_custom_call.1} parent=91 // pred_check
          %p604 = pneg %p203
        $region106: #{tpu_custom_call.1} parent=91 // pred_check_branch
          %606 = sbr.rel (%p604) target = $region108
        $region107: #{tpu_custom_call.1} parent=91 // pred_region
          %607 = dma.done [#allocation8], 3072
        $region108: #{tpu_custom_call.1} parent=91 // pred_fallthru
          _
        // Predicated region
        $region109: #{tpu_custom_call.1} parent=91 // pred_check
          %p608 = pneg %p266
        $region110: #{tpu_custom_call.1} parent=91 // pred_check_branch
          %610 = sbr.rel (%p608) target = $region112
        $region111: #{tpu_custom_call.1} parent=91 // pred_region
          %611 = dma.done [#allocation8], 3072
        $region112: #{tpu_custom_call.1} parent=91 // pred_fallthru
          _
        // Predicated region
        $region113: #{tpu_custom_call.1} parent=91 // pred_check
          %p612 = pneg %p329
        $region114: #{tpu_custom_call.1} parent=91 // pred_check_branch
          %614 = sbr.rel (%p612) target = $region116
        $region115: #{tpu_custom_call.1} parent=91 // pred_region
          %615 = dma.done [#allocation11], 3072
        $region116: #{tpu_custom_call.1} parent=91 // pred_fallthru
          _
        %s616 = sand.u32 %s43, 1
        %s617 = scalar_lea.sflag [#allocation3], %s616
        %s618 = sand.u32 %s43, 1
        %s619 = smul.addr %s618, 8
        %s620 = scalar_lea.vmem [#allocation2], %s619
        %p621 = pneg %p56
        %p622 = pneg %p53
        %p623 = pneg %p77
        %p624 = pneg %p74
        %p625 = pneg %p98
        %p626 = pneg %p95
        %p627 = pneg %p119
        %p628 = pneg %p116
        %p629 = pneg %p140
        %p630 = pneg %p137
        %p631 = pneg %p161
        %p632 = pneg %p158
        %p633 = pneg %p182
        %p634 = pneg %p179
        %p635 = pneg %p203
        %p636 = pneg %p200
        %p637 = pneg %p224
        %p638 = pneg %p221
        %p639 = pneg %p245
        %p640 = pneg %p242
        %p641 = pneg %p266
        %p642 = pneg %p263
        %p643 = pneg %p287
        %p644 = pneg %p284
        %p645 = pneg %p308
        %p646 = pneg %p305
        %p647 = pneg %p329
        %p648 = pneg %p326
        %p649 = pneg %p350
        %p650 = pneg %p347
        %p651 = pneg %p371
        %p652 = pneg %p368
        %p653 = pneg %p392
        %p654 = pneg %p389
        %p655 = pneg %p413
        %p656 = pneg %p410
        %p657 = pneg %p439
        %p658 = pneg %p436
        %p659 = scmp.lt.s32.totalorder %s35, 1
        %s660 = scalar_select %p659, %s35, 1
        %s661 = smul.addr %s660, 8
        %s662 = scalar_lea.vmem %s18, %s661
        %p663 = scmp.lt.s32.totalorder %s35, 1
        %s664 = scalar_select %p663, %s35, 1
        %s665 = smul.addr %s664, 8
        %s666 = scalar_lea.vmem %s18, %s665
        %v668 = vlaneseq
        %v669 = vshrl.u32 %v668, 7
        %v670 = vadd.s32 %v669, 8
        %vm671 = vcmp.eq.s32.totalorder %v669, 0
        %vm672 = vcmp.eq.s32.totalorder %v670, 0
        %vm673 = vcmp.eq.s32.totalorder %v669, 15
        %vm674 = vcmp.eq.s32.totalorder %v670, 15
        %v675 = vld [vmem:[%s591] sm:$0xf]
        %v676 = vld [vmem:[%s591 + $0x4] sm:$0xf]
        %v677 = vunpack.c.l.bf16 %v675
        %v678 = vunpack.c.l.bf16 %v676
        %v679 = vrot.slane %v677, 7
        %v680 = vrot.slane %v678, 7
        %vm681 = vcmp.lt.s32.totalorder %v669, 1
        %v682 = vsel %vm681, %v679, %v680
        %v683 = vsel %vm681, %v680, %v679
        %v684 = vsel %vm671, 0.0, %v683
        %v685 = vsel %vm672, 0.0, %v682
        %v686 = vpack.c.bf16 %v685, %v684
        %v687 = vrot.slane %v677, 1
        %v688 = vrot.slane %v678, 1
        %vm689 = vcmp.lt.s32.totalorder %v669, 7
        %v690 = vsel %vm689, %v687, %v688
        %v691 = vsel %vm689, %v688, %v687
        %v692 = vsel %vm673, 0.0, %v690
        %v693 = vsel %vm674, 0.0, %v691
        %v694 = vpack.c.bf16 %v693, %v692
        %s695 = scalar_lea.vmem [#allocation4], 64
        %v696 = vld [vmem:[%s695] sm:$0xf]
        %v697 = vld [vmem:[%s695 + $0x4] sm:$0xf]
        %v698 = vld [vmem:[%s695 + $0x8] sm:$0xf]
        %v699 = vld [vmem:[%s695 + $0xc] sm:$0xf]
        %v700 = vld [vmem:[%s695 + $0x10] sm:$0xf]
        %v701 = vld [vmem:[%s695 + $0x14] sm:$0xf]
        %v702 = vld [vmem:[%s695 + $0x18] sm:$0xf]
        %v703 = vld [vmem:[%s695 + $0x1c] sm:$0xf]
        %v704 = vld [vmem:[%s695 + $0x20] sm:$0xf]
        %v705 = vld [vmem:[%s695 + $0x24] sm:$0xf]
        %v706 = vld [vmem:[%s695 + $0x28] sm:$0xf]
        %v707 = vld [vmem:[%s695 + $0x2c] sm:$0xf]
        %v708 = vld [vmem:[%s695 + $0x30] sm:$0xf]
        %v709 = vld [vmem:[%s695 + $0x34] sm:$0xf]
        %v710 = vld [vmem:[%s695 + $0x38] sm:$0xf]
        %v711 = vld [vmem:[%s695 + $0x3c] sm:$0xf]
        %v712 = vld [vmem:[#allocation4] sm:$0xf]
        %v713 = vld [vmem:[#allocation4 + $0x4] sm:$0xf]
        %v714 = vld [vmem:[#allocation4 + $0x8] sm:$0xf]
        %v715 = vld [vmem:[#allocation4 + $0xc] sm:$0xf]
        %v716 = vld [vmem:[#allocation4 + $0x10] sm:$0xf]
        %v717 = vld [vmem:[#allocation4 + $0x14] sm:$0xf]
        %v718 = vld [vmem:[#allocation4 + $0x18] sm:$0xf]
        %v719 = vld [vmem:[#allocation4 + $0x1c] sm:$0xf]
        %v720 = vld [vmem:[#allocation4 + $0x20] sm:$0xf]
        %v721 = vld [vmem:[#allocation4 + $0x24] sm:$0xf]
        %v722 = vld [vmem:[#allocation4 + $0x28] sm:$0xf]
        %v723 = vld [vmem:[#allocation4 + $0x2c] sm:$0xf]
        %v724 = vld [vmem:[#allocation4 + $0x30] sm:$0xf]
        %v725 = vld [vmem:[#allocation4 + $0x34] sm:$0xf]
        %v726 = vld [vmem:[#allocation4 + $0x38] sm:$0xf]
        %v727 = vld [vmem:[#allocation4 + $0x3c] sm:$0xf]
        %v744 = vunpack.c.l.b16 %v712
        %v745 = vunpack.c.l.b16 %v713
        %v746 = vunpack.c.l.b16 %v714
        %v747 = vunpack.c.l.b16 %v715
        %v748 = vunpack.c.l.b16 %v716
        %v749 = vunpack.c.l.b16 %v717
        %v750 = vunpack.c.l.b16 %v718
        %v751 = vunpack.c.l.b16 %v719
        %v752 = vunpack.c.l.b16 %v720
        %v753 = vunpack.c.l.b16 %v721
        %v754 = vunpack.c.l.b16 %v722
        %v755 = vunpack.c.l.b16 %v723
        %v756 = vunpack.c.l.b16 %v724
        %v757 = vunpack.c.l.b16 %v725
        %v758 = vunpack.c.l.b16 %v726
        %v759 = vunpack.c.l.b16 %v727
        %v760 = vpack.c.b16 %v745, %v744
        %v761 = vpack.c.b16 %v747, %v746
        %v762 = vpack.c.b16 %v749, %v748
        %v763 = vpack.c.b16 %v751, %v750
        %v764 = vpack.c.b16 %v753, %v752
        %v765 = vpack.c.b16 %v755, %v754
        %v766 = vpack.c.b16 %v757, %v756
        %v767 = vpack.c.b16 %v759, %v758
        %776 = vmatprep.subr.bf16.mxu0 0
        %777 = vmatpush1.bf16.msra.mxu0 %v760
        %778 = vmatprep.subr.bf16.mxu0 0
        %779 = vmatpush1.bf16.msra.mxu0 %v761
        %780 = vmatprep.subr.bf16.mxu0 0
        %781 = vmatpush1.bf16.msra.mxu0 %v762
        %782 = vmatprep.subr.bf16.mxu0 0
        %783 = vmatpush1.bf16.msra.mxu0 %v763
        %784 = vmatprep.subr.bf16.mxu0 0
        %785 = vmatpush1.bf16.msra.mxu0 %v764
        %786 = vmatprep.subr.bf16.mxu0 0
        %787 = vmatpush1.bf16.msra.mxu0 %v765
        %788 = vmatprep.subr.bf16.mxu0 0
        %789 = vmatpush1.bf16.msra.mxu0 %v766
        %790 = vmatprep.subr.bf16.mxu0 0
        %791 = vmatpush1.bf16.msra.mxu0 %v767
        %792 = vmatprep.subr.bf16.mxu0 0
        %793 = vmatpush1.bf16.msra.mxu0 0
        %794 = vmatprep.subr.bf16.mxu0 0
        %795 = vmatpush1.bf16.msra.mxu0 0
        %796 = vmatprep.subr.bf16.mxu0 0
        %797 = vmatpush1.bf16.msra.mxu0 0
        %798 = vmatprep.subr.bf16.mxu0 0
        %799 = vmatpush1.bf16.msra.mxu0 0
        %800 = vmatprep.subr.bf16.mxu0 0
        %801 = vmatpush1.bf16.msra.mxu0 0
        %802 = vmatprep.subr.bf16.mxu0 0
        %803 = vmatpush1.bf16.msra.mxu0 0
        %804 = vmatprep.subr.bf16.mxu0 0
        %805 = vmatpush1.bf16.msra.mxu0 0
        %806 = vmatprep.subr.bf16.mxu0 0
        %807 = vmatpush1.bf16.msra.mxu0 0
        %808 = vmatprep.mubr.bf16.mxu0 0
        %809 = vmatmul.mubr.bf16.gmra.mrb[0].mxu0 %v686
        %v810 = vpop.f32.mrb[0].mxu0
        %v811 = vadd.f32 0.0, %v810
        %v812 = vpop.f32.mrb[0].mxu0
        %v813 = vpop.f32.mrb[0].mxu0
        %v814 = vadd.f32 0.0, %v813
        %v815 = vpop.f32.mrb[0].mxu0
        %816 = vdwg.mxu0
        %v819 = vunpack.c.l.b16 %v675
        %v820 = vunpack.c.l.b16 %v676
        %v821 = vpack.c.b16 %v820, %v819
        %v839 = vunpack.c.l.b16 %v696
        %v840 = vunpack.c.l.b16 %v697
        %v841 = vunpack.c.l.b16 %v698
        %v842 = vunpack.c.l.b16 %v699
        %v843 = vunpack.c.l.b16 %v700
        %v844 = vunpack.c.l.b16 %v701
        %v845 = vunpack.c.l.b16 %v702
        %v846 = vunpack.c.l.b16 %v703
        %v847 = vunpack.c.l.b16 %v704
        %v848 = vunpack.c.l.b16 %v705
        %v849 = vunpack.c.l.b16 %v706
        %v850 = vunpack.c.l.b16 %v707
        %v851 = vunpack.c.l.b16 %v708
        %v852 = vunpack.c.l.b16 %v709
        %v853 = vunpack.c.l.b16 %v710
        %v854 = vunpack.c.l.b16 %v711
        %v855 = vpack.c.b16 %v840, %v839
        %v856 = vpack.c.b16 %v842, %v841
        %v857 = vpack.c.b16 %v844, %v843
        %v858 = vpack.c.b16 %v846, %v845
        %v859 = vpack.c.b16 %v848, %v847
        %v860 = vpack.c.b16 %v850, %v849
        %v861 = vpack.c.b16 %v852, %v851
        %v862 = vpack.c.b16 %v854, %v853
        %871 = vmatprep.subr.bf16.mxu0 0
        %872 = vmatpush1.bf16.msra.mxu0 %v855
        %873 = vmatprep.subr.bf16.mxu0 0
        %874 = vmatpush1.bf16.msra.mxu0 %v856
        %875 = vmatprep.subr.bf16.mxu0 0
        %876 = vmatpush1.bf16.msra.mxu0 %v857
        %877 = vmatprep.subr.bf16.mxu0 0
        %878 = vmatpush1.bf16.msra.mxu0 %v858
        %879 = vmatprep.subr.bf16.mxu0 0
        %880 = vmatpush1.bf16.msra.mxu0 %v859
        %881 = vmatprep.subr.bf16.mxu0 0
        %882 = vmatpush1.bf16.msra.mxu0 %v860
        %883 = vmatprep.subr.bf16.mxu0 0
        %884 = vmatpush1.bf16.msra.mxu0 %v861
        %885 = vmatprep.subr.bf16.mxu0 0
        %886 = vmatpush1.bf16.msra.mxu0 %v862
        %887 = vmatprep.subr.bf16.mxu0 0
        %888 = vmatpush1.bf16.msra.mxu0 0
        %889 = vmatprep.subr.bf16.mxu0 0
        %890 = vmatpush1.bf16.msra.mxu0 0
        %891 = vmatprep.subr.bf16.mxu0 0
        %892 = vmatpush1.bf16.msra.mxu0 0
        %893 = vmatprep.subr.bf16.mxu0 0
        %894 = vmatpush1.bf16.msra.mxu0 0
        %895 = vmatprep.subr.bf16.mxu0 0
        %896 = vmatpush1.bf16.msra.mxu0 0
        %897 = vmatprep.subr.bf16.mxu0 0
        %898 = vmatpush1.bf16.msra.mxu0 0
        %899 = vmatprep.subr.bf16.mxu0 0
        %900 = vmatpush1.bf16.msra.mxu0 0
        %901 = vmatprep.subr.bf16.mxu0 0
        %902 = vmatpush1.bf16.msra.mxu0 0
        %903 = vmatprep.mubr.bf16.mxu0 0
        %904 = vmatmul.mubr.bf16.gmra.mrb[0].mxu0 %v821
        %v905 = vpop.f32.mrb[0].mxu0
        %v906 = vadd.f32 %v811, %v905
        %v907 = vpop.f32.mrb[0].mxu0
        %v908 = vpop.f32.mrb[0].mxu0
        %v909 = vadd.f32 %v814, %v908
        %v910 = vpop.f32.mrb[0].mxu0
        %911 = vdwg.mxu0
        %s912 = scalar_lea.vmem [#allocation4], 128
        %v913 = vld [vmem:[%s912] sm:$0xf]
        %v914 = vld [vmem:[%s912 + $0x4] sm:$0xf]
        %v915 = vld [vmem:[%s912 + $0x8] sm:$0xf]
        %v916 = vld [vmem:[%s912 + $0xc] sm:$0xf]
        %v917 = vld [vmem:[%s912 + $0x10] sm:$0xf]
        %v918 = vld [vmem:[%s912 + $0x14] sm:$0xf]
        %v919 = vld [vmem:[%s912 + $0x18] sm:$0xf]
        %v920 = vld [vmem:[%s912 + $0x1c] sm:$0xf]
        %v921 = vld [vmem:[%s912 + $0x20] sm:$0xf]
        %v922 = vld [vmem:[%s912 + $0x24] sm:$0xf]
        %v923 = vld [vmem:[%s912 + $0x28] sm:$0xf]
        %v924 = vld [vmem:[%s912 + $0x2c] sm:$0xf]
        %v925 = vld [vmem:[%s912 + $0x30] sm:$0xf]
        %v926 = vld [vmem:[%s912 + $0x34] sm:$0xf]
        %v927 = vld [vmem:[%s912 + $0x38] sm:$0xf]
        %v928 = vld [vmem:[%s912 + $0x3c] sm:$0xf]
        %v945 = vunpack.c.l.b16 %v913
        %v946 = vunpack.c.l.b16 %v914
        %v947 = vunpack.c.l.b16 %v915
        %v948 = vunpack.c.l.b16 %v916
        %v949 = vunpack.c.l.b16 %v917
        %v950 = vunpack.c.l.b16 %v918
        %v951 = vunpack.c.l.b16 %v919
        %v952 = vunpack.c.l.b16 %v920
        %v953 = vunpack.c.l.b16 %v921
        %v954 = vunpack.c.l.b16 %v922
        %v955 = vunpack.c.l.b16 %v923
        %v956 = vunpack.c.l.b16 %v924
        %v957 = vunpack.c.l.b16 %v925
        %v958 = vunpack.c.l.b16 %v926
        %v959 = vunpack.c.l.b16 %v927
        %v960 = vunpack.c.l.b16 %v928
        %v961 = vpack.c.b16 %v946, %v945
        %v962 = vpack.c.b16 %v948, %v947
        %v963 = vpack.c.b16 %v950, %v949
        %v964 = vpack.c.b16 %v952, %v951
        %v965 = vpack.c.b16 %v954, %v953
        %v966 = vpack.c.b16 %v956, %v955
        %v967 = vpack.c.b16 %v958, %v957
        %v968 = vpack.c.b16 %v960, %v959
        %977 = vmatprep.subr.bf16.mxu0 0
        %978 = vmatpush1.bf16.msra.mxu0 %v961
        %979 = vmatprep.subr.bf16.mxu0 0
        %980 = vmatpush1.bf16.msra.mxu0 %v962
        %981 = vmatprep.subr.bf16.mxu0 0
        %982 = vmatpush1.bf16.msra.mxu0 %v963
        %983 = vmatprep.subr.bf16.mxu0 0
        %984 = vmatpush1.bf16.msra.mxu0 %v964
        %985 = vmatprep.subr.bf16.mxu0 0
        %986 = vmatpush1.bf16.msra.mxu0 %v965
        %987 = vmatprep.subr.bf16.mxu0 0
        %988 = vmatpush1.bf16.msra.mxu0 %v966
        %989 = vmatprep.subr.bf16.mxu0 0
        %990 = vmatpush1.bf16.msra.mxu0 %v967
        %991 = vmatprep.subr.bf16.mxu0 0
        %992 = vmatpush1.bf16.msra.mxu0 %v968
        %993 = vmatprep.subr.bf16.mxu0 0
        %994 = vmatpush1.bf16.msra.mxu0 0
        %995 = vmatprep.subr.bf16.mxu0 0
        %996 = vmatpush1.bf16.msra.mxu0 0
        %997 = vmatprep.subr.bf16.mxu0 0
        %998 = vmatpush1.bf16.msra.mxu0 0
        %999 = vmatprep.subr.bf16.mxu0 0
        %1000 = vmatpush1.bf16.msra.mxu0 0
        %1001 = vmatprep.subr.bf16.mxu0 0
        %1002 = vmatpush1.bf16.msra.mxu0 0
        %1003 = vmatprep.subr.bf16.mxu0 0
        %1004 = vmatpush1.bf16.msra.mxu0 0
        %1005 = vmatprep.subr.bf16.mxu0 0
        %1006 = vmatpush1.bf16.msra.mxu0 0
        %1007 = vmatprep.subr.bf16.mxu0 0
        %1008 = vmatpush1.bf16.msra.mxu0 0
        %1009 = vmatprep.mubr.bf16.mxu0 0
        %1010 = vmatmul.mubr.bf16.gmra.mrb[0].mxu0 %v694
        %v1011 = vpop.f32.mrb[0].mxu0
        %v1012 = vadd.f32 0.0, %v1011
        %v1013 = vpop.f32.mrb[0].mxu0
        %v1014 = vpop.f32.mrb[0].mxu0
        %v1015 = vadd.f32 0.0, %v1014
        %v1016 = vpop.f32.mrb[0].mxu0
        %1017 = vdwg.mxu0
        %v1018 = vadd.f32 %v906, %v1012
        %v1019 = vadd.f32 %v909, %v1015
        %v1020 = vld [vmem:[%s2] sm:$0x1]
        %v1022 = vlaneseq
        %v1023 = vshrl.u32 %v1022, 7
        %v1024 = vsub.s32 0, %v1023
        %v1025 = vrot.slane %v1020, %v1024
        %v1027 = vmul.f32 %v1018, %v1025
        %v1028 = vmul.f32 %v1019, %v1025
        %v1029 = vld [vmem:[%s3] sm:$0x1]
        %v1031 = vlaneseq
        %v1032 = vshrl.u32 %v1031, 7
        %v1033 = vsub.s32 0, %v1032
        %v1034 = vrot.slane %v1029, %v1033
        %v1036 = vadd.f32 %v1027, %v1034
        %v1037 = vadd.f32 %v1028, %v1034
        %v1038 = vmax.f32 %v1036, 0.0
        %v1039 = vmax.f32 %v1037, 0.0
        %v1040 = vpack.c.bf16 %v1039, %v1038
        %v1041 = vrot.slane %v1038, 7
        %v1042 = vrot.slane %v1039, 7
        %v1043 = vsel %vm681, %v1041, %v1042
        %v1044 = vsel %vm681, %v1042, %v1041
        %v1045 = vsel %vm671, 0.0, %v1044
        %v1046 = vsel %vm672, 0.0, %v1043
        %v1047 = vpack.c.bf16 %v1046, %v1045
        %v1048 = vrot.slane %v1038, 1
        %v1049 = vrot.slane %v1039, 1
        %v1050 = vsel %vm689, %v1048, %v1049
        %v1051 = vsel %vm689, %v1049, %v1048
        %v1052 = vsel %vm673, 0.0, %v1050
        %v1053 = vsel %vm674, 0.0, %v1051
        %v1054 = vpack.c.bf16 %v1053, %v1052
        %s1055 = scalar_lea.vmem [#allocation6], 64
        %v1056 = vld [vmem:[%s1055] sm:$0xf]
        %v1057 = vld [vmem:[%s1055 + $0x4] sm:$0xf]
        %v1058 = vld [vmem:[%s1055 + $0x8] sm:$0xf]
        %v1059 = vld [vmem:[%s1055 + $0xc] sm:$0xf]
        %v1060 = vld [vmem:[%s1055 + $0x10] sm:$0xf]
        %v1061 = vld [vmem:[%s1055 + $0x14] sm:$0xf]
        %v1062 = vld [vmem:[%s1055 + $0x18] sm:$0xf]
        %v1063 = vld [vmem:[%s1055 + $0x1c] sm:$0xf]
        %v1064 = vld [vmem:[%s1055 + $0x20] sm:$0xf]
        %v1065 = vld [vmem:[%s1055 + $0x24] sm:$0xf]
        %v1066 = vld [vmem:[%s1055 + $0x28] sm:$0xf]
        %v1067 = vld [vmem:[%s1055 + $0x2c] sm:$0xf]
        %v1068 = vld [vmem:[%s1055 + $0x30] sm:$0xf]
        %v1069 = vld [vmem:[%s1055 + $0x34] sm:$0xf]
        %v1070 = vld [vmem:[%s1055 + $0x38] sm:$0xf]
        %v1071 = vld [vmem:[%s1055 + $0x3c] sm:$0xf]
        %v1072 = vld [vmem:[#allocation6] sm:$0xf]
        %v1073 = vld [vmem:[#allocation6 + $0x4] sm:$0xf]
        %v1074 = vld [vmem:[#allocation6 + $0x8] sm:$0xf]
        %v1075 = vld [vmem:[#allocation6 + $0xc] sm:$0xf]
        %v1076 = vld [vmem:[#allocation6 + $0x10] sm:$0xf]
        %v1077 = vld [vmem:[#allocation6 + $0x14] sm:$0xf]
        %v1078 = vld [vmem:[#allocation6 + $0x18] sm:$0xf]
        %v1079 = vld [vmem:[#allocation6 + $0x1c] sm:$0xf]
        %v1080 = vld [vmem:[#allocation6 + $0x20] sm:$0xf]
        %v1081 = vld [vmem:[#allocation6 + $0x24] sm:$0xf]
        %v1082 = vld [vmem:[#allocation6 + $0x28] sm:$0xf]
        %v1083 = vld [vmem:[#allocation6 + $0x2c] sm:$0xf]
        %v1084 = vld [vmem:[#allocation6 + $0x30] sm:$0xf]
        %v1085 = vld [vmem:[#allocation6 + $0x34] sm:$0xf]
        %v1086 = vld [vmem:[#allocation6 + $0x38] sm:$0xf]
        %v1087 = vld [vmem:[#allocation6 + $0x3c] sm:$0xf]
        %v1104 = vunpack.c.l.b16 %v1072
        %v1105 = vunpack.c.l.b16 %v1073
        %v1106 = vunpack.c.l.b16 %v1074
        %v1107 = vunpack.c.l.b16 %v1075
        %v1108 = vunpack.c.l.b16 %v1076
        %v1109 = vunpack.c.l.b16 %v1077
        %v1110 = vunpack.c.l.b16 %v1078
        %v1111 = vunpack.c.l.b16 %v1079
        %v1112 = vunpack.c.l.b16 %v1080
        %v1113 = vunpack.c.l.b16 %v1081
        %v1114 = vunpack.c.l.b16 %v1082
        %v1115 = vunpack.c.l.b16 %v1083
        %v1116 = vunpack.c.l.b16 %v1084
        %v1117 = vunpack.c.l.b16 %v1085
        %v1118 = vunpack.c.l.b16 %v1086
        %v1119 = vunpack.c.l.b16 %v1087
        %v1120 = vpack.c.b16 %v1105, %v1104
        %v1121 = vpack.c.b16 %v1107, %v1106
        %v1122 = vpack.c.b16 %v1109, %v1108
        %v1123 = vpack.c.b16 %v1111, %v1110
        %v1124 = vpack.c.b16 %v1113, %v1112
        %v1125 = vpack.c.b16 %v1115, %v1114
        %v1126 = vpack.c.b16 %v1117, %v1116
        %v1127 = vpack.c.b16 %v1119, %v1118
        %1136 = vmatprep.subr.bf16.mxu0 0
        %1137 = vmatpush1.bf16.msra.mxu0 %v1120
        %1138 = vmatprep.subr.bf16.mxu0 0
        %1139 = vmatpush1.bf16.msra.mxu0 %v1121
        %1140 = vmatprep.subr.bf16.mxu0 0
        %1141 = vmatpush1.bf16.msra.mxu0 %v1122
        %1142 = vmatprep.subr.bf16.mxu0 0
        %1143 = vmatpush1.bf16.msra.mxu0 %v1123
        %1144 = vmatprep.subr.bf16.mxu0 0
        %1145 = vmatpush1.bf16.msra.mxu0 %v1124
        %1146 = vmatprep.subr.bf16.mxu0 0
        %1147 = vmatpush1.bf16.msra.mxu0 %v1125
        %1148 = vmatprep.subr.bf16.mxu0 0
        %1149 = vmatpush1.bf16.msra.mxu0 %v1126
        %1150 = vmatprep.subr.bf16.mxu0 0
        %1151 = vmatpush1.bf16.msra.mxu0 %v1127
        %1152 = vmatprep.subr.bf16.mxu0 0
        %1153 = vmatpush1.bf16.msra.mxu0 0
        %1154 = vmatprep.subr.bf16.mxu0 0
        %1155 = vmatpush1.bf16.msra.mxu0 0
        %1156 = vmatprep.subr.bf16.mxu0 0
        %1157 = vmatpush1.bf16.msra.mxu0 0
        %1158 = vmatprep.subr.bf16.mxu0 0
        %1159 = vmatpush1.bf16.msra.mxu0 0
        %1160 = vmatprep.subr.bf16.mxu0 0
        %1161 = vmatpush1.bf16.msra.mxu0 0
        %1162 = vmatprep.subr.bf16.mxu0 0
        %1163 = vmatpush1.bf16.msra.mxu0 0
        %1164 = vmatprep.subr.bf16.mxu0 0
        %1165 = vmatpush1.bf16.msra.mxu0 0
        %1166 = vmatprep.subr.bf16.mxu0 0
        %1167 = vmatpush1.bf16.msra.mxu0 0
        %1168 = vmatprep.mubr.bf16.mxu0 0
        %1169 = vmatmul.mubr.bf16.gmra.mrb[0].mxu0 %v1047
        %v1170 = vpop.f32.mrb[0].mxu0
        %v1171 = vadd.f32 0.0, %v1170
        %v1172 = vpop.f32.mrb[0].mxu0
        %v1173 = vpop.f32.mrb[0].mxu0
        %v1174 = vadd.f32 0.0, %v1173
        %v1175 = vpop.f32.mrb[0].mxu0
        %1176 = vdwg.mxu0
        %v1193 = vunpack.c.l.b16 %v1056
        %v1194 = vunpack.c.l.b16 %v1057
        %v1195 = vunpack.c.l.b16 %v1058
        %v1196 = vunpack.c.l.b16 %v1059
        %v1197 = vunpack.c.l.b16 %v1060
        %v1198 = vunpack.c.l.b16 %v1061
        %v1199 = vunpack.c.l.b16 %v1062
        %v1200 = vunpack.c.l.b16 %v1063
        %v1201 = vunpack.c.l.b16 %v1064
        %v1202 = vunpack.c.l.b16 %v1065
        %v1203 = vunpack.c.l.b16 %v1066
        %v1204 = vunpack.c.l.b16 %v1067
        %v1205 = vunpack.c.l.b16 %v1068
        %v1206 = vunpack.c.l.b16 %v1069
        %v1207 = vunpack.c.l.b16 %v1070
        %v1208 = vunpack.c.l.b16 %v1071
        %v1209 = vpack.c.b16 %v1194, %v1193
        %v1210 = vpack.c.b16 %v1196, %v1195
        %v1211 = vpack.c.b16 %v1198, %v1197
        %v1212 = vpack.c.b16 %v1200, %v1199
        %v1213 = vpack.c.b16 %v1202, %v1201
        %v1214 = vpack.c.b16 %v1204, %v1203
        %v1215 = vpack.c.b16 %v1206, %v1205
        %v1216 = vpack.c.b16 %v1208, %v1207
        %1225 = vmatprep.subr.bf16.mxu0 0
        %1226 = vmatpush1.bf16.msra.mxu0 %v1209
        %1227 = vmatprep.subr.bf16.mxu0 0
        %1228 = vmatpush1.bf16.msra.mxu0 %v1210
        %1229 = vmatprep.subr.bf16.mxu0 0
        %1230 = vmatpush1.bf16.msra.mxu0 %v1211
        %1231 = vmatprep.subr.bf16.mxu0 0
        %1232 = vmatpush1.bf16.msra.mxu0 %v1212
        %1233 = vmatprep.subr.bf16.mxu0 0
        %1234 = vmatpush1.bf16.msra.mxu0 %v1213
        %1235 = vmatprep.subr.bf16.mxu0 0
        %1236 = vmatpush1.bf16.msra.mxu0 %v1214
        %1237 = vmatprep.subr.bf16.mxu0 0
        %1238 = vmatpush1.bf16.msra.mxu0 %v1215
        %1239 = vmatprep.subr.bf16.mxu0 0
        %1240 = vmatpush1.bf16.msra.mxu0 %v1216
        %1241 = vmatprep.subr.bf16.mxu0 0
        %1242 = vmatpush1.bf16.msra.mxu0 0
        %1243 = vmatprep.subr.bf16.mxu0 0
        %1244 = vmatpush1.bf16.msra.mxu0 0
        %1245 = vmatprep.subr.bf16.mxu0 0
        %1246 = vmatpush1.bf16.msra.mxu0 0
        %1247 = vmatprep.subr.bf16.mxu0 0
        %1248 = vmatpush1.bf16.msra.mxu0 0
        %1249 = vmatprep.subr.bf16.mxu0 0
        %1250 = vmatpush1.bf16.msra.mxu0 0
        %1251 = vmatprep.subr.bf16.mxu0 0
        %1252 = vmatpush1.bf16.msra.mxu0 0
        %1253 = vmatprep.subr.bf16.mxu0 0
        %1254 = vmatpush1.bf16.msra.mxu0 0
        %1255 = vmatprep.subr.bf16.mxu0 0
        %1256 = vmatpush1.bf16.msra.mxu0 0
        %1257 = vmatprep.mubr.bf16.mxu0 0
        %1258 = vmatmul.mubr.bf16.gmra.mrb[0].mxu0 %v1040
        %v1259 = vpop.f32.mrb[0].mxu0
        %v1260 = vadd.f32 %v1171, %v1259
        %v1261 = vpop.f32.mrb[0].mxu0
        %v1262 = vpop.f32.mrb[0].mxu0
        %v1263 = vadd.f32 %v1174, %v1262
        %v1264 = vpop.f32.mrb[0].mxu0
        %1265 = vdwg.mxu0
        %s1266 = scalar_lea.vmem [#allocation6], 128
        %v1267 = vld [vmem:[%s1266] sm:$0xf]
        %v1268 = vld [vmem:[%s1266 + $0x4] sm:$0xf]
        %v1269 = vld [vmem:[%s1266 + $0x8] sm:$0xf]
        %v1270 = vld [vmem:[%s1266 + $0xc] sm:$0xf]
        %v1271 = vld [vmem:[%s1266 + $0x10] sm:$0xf]
        %v1272 = vld [vmem:[%s1266 + $0x14] sm:$0xf]
        %v1273 = vld [vmem:[%s1266 + $0x18] sm:$0xf]
        %v1274 = vld [vmem:[%s1266 + $0x1c] sm:$0xf]
        %v1275 = vld [vmem:[%s1266 + $0x20] sm:$0xf]
        %v1276 = vld [vmem:[%s1266 + $0x24] sm:$0xf]
        %v1277 = vld [vmem:[%s1266 + $0x28] sm:$0xf]
        %v1278 = vld [vmem:[%s1266 + $0x2c] sm:$0xf]
        %v1279 = vld [vmem:[%s1266 + $0x30] sm:$0xf]
        %v1280 = vld [vmem:[%s1266 + $0x34] sm:$0xf]
        %v1281 = vld [vmem:[%s1266 + $0x38] sm:$0xf]
        %v1282 = vld [vmem:[%s1266 + $0x3c] sm:$0xf]
        %v1299 = vunpack.c.l.b16 %v1267
        %v1300 = vunpack.c.l.b16 %v1268
        %v1301 = vunpack.c.l.b16 %v1269
        %v1302 = vunpack.c.l.b16 %v1270
        %v1303 = vunpack.c.l.b16 %v1271
        %v1304 = vunpack.c.l.b16 %v1272
        %v1305 = vunpack.c.l.b16 %v1273
        %v1306 = vunpack.c.l.b16 %v1274
        %v1307 = vunpack.c.l.b16 %v1275
        %v1308 = vunpack.c.l.b16 %v1276
        %v1309 = vunpack.c.l.b16 %v1277
        %v1310 = vunpack.c.l.b16 %v1278
        %v1311 = vunpack.c.l.b16 %v1279
        %v1312 = vunpack.c.l.b16 %v1280
        %v1313 = vunpack.c.l.b16 %v1281
        %v1314 = vunpack.c.l.b16 %v1282
        %v1315 = vpack.c.b16 %v1300, %v1299
        %v1316 = vpack.c.b16 %v1302, %v1301
        %v1317 = vpack.c.b16 %v1304, %v1303
        %v1318 = vpack.c.b16 %v1306, %v1305
        %v1319 = vpack.c.b16 %v1308, %v1307
        %v1320 = vpack.c.b16 %v1310, %v1309
        %v1321 = vpack.c.b16 %v1312, %v1311
        %v1322 = vpack.c.b16 %v1314, %v1313
        %1331 = vmatprep.subr.bf16.mxu0 0
        %1332 = vmatpush1.bf16.msra.mxu0 %v1315
        %1333 = vmatprep.subr.bf16.mxu0 0
        %1334 = vmatpush1.bf16.msra.mxu0 %v1316
        %1335 = vmatprep.subr.bf16.mxu0 0
        %1336 = vmatpush1.bf16.msra.mxu0 %v1317
        %1337 = vmatprep.subr.bf16.mxu0 0
        %1338 = vmatpush1.bf16.msra.mxu0 %v1318
        %1339 = vmatprep.subr.bf16.mxu0 0
        %1340 = vmatpush1.bf16.msra.mxu0 %v1319
        %1341 = vmatprep.subr.bf16.mxu0 0
        %1342 = vmatpush1.bf16.msra.mxu0 %v1320
        %1343 = vmatprep.subr.bf16.mxu0 0
        %1344 = vmatpush1.bf16.msra.mxu0 %v1321
        %1345 = vmatprep.subr.bf16.mxu0 0
        %1346 = vmatpush1.bf16.msra.mxu0 %v1322
        %1347 = vmatprep.subr.bf16.mxu0 0
        %1348 = vmatpush1.bf16.msra.mxu0 0
        %1349 = vmatprep.subr.bf16.mxu0 0
        %1350 = vmatpush1.bf16.msra.mxu0 0
        %1351 = vmatprep.subr.bf16.mxu0 0
        %1352 = vmatpush1.bf16.msra.mxu0 0
        %1353 = vmatprep.subr.bf16.mxu0 0
        %1354 = vmatpush1.bf16.msra.mxu0 0
        %1355 = vmatprep.subr.bf16.mxu0 0
        %1356 = vmatpush1.bf16.msra.mxu0 0
        %1357 = vmatprep.subr.bf16.mxu0 0
        %1358 = vmatpush1.bf16.msra.mxu0 0
        %1359 = vmatprep.subr.bf16.mxu0 0
        %1360 = vmatpush1.bf16.msra.mxu0 0
        %1361 = vmatprep.subr.bf16.mxu0 0
        %1362 = vmatpush1.bf16.msra.mxu0 0
        %1363 = vmatprep.mubr.bf16.mxu0 0
        %1364 = vmatmul.mubr.bf16.gmra.mrb[0].mxu0 %v1054
        %v1365 = vpop.f32.mrb[0].mxu0
        %v1366 = vadd.f32 0.0, %v1365
        %v1367 = vpop.f32.mrb[0].mxu0
        %v1368 = vpop.f32.mrb[0].mxu0
        %v1369 = vadd.f32 0.0, %v1368
        %v1370 = vpop.f32.mrb[0].mxu0
        %1371 = vdwg.mxu0
        %v1372 = vadd.f32 %v1260, %v1366
        %v1373 = vadd.f32 %v1263, %v1369
        %v1374 = vld [vmem:[%s5] sm:$0x1]
        %v1376 = vlaneseq
        %v1377 = vshrl.u32 %v1376, 7
        %v1378 = vsub.s32 0, %v1377
        %v1379 = vrot.slane %v1374, %v1378
        %v1381 = vmul.f32 %v1372, %v1379
        %v1382 = vmul.f32 %v1373, %v1379
        %v1383 = vld [vmem:[%s6] sm:$0x1]
        %v1385 = vlaneseq
        %v1386 = vshrl.u32 %v1385, 7
        %v1387 = vsub.s32 0, %v1386
        %v1388 = vrot.slane %v1383, %v1387
        %v1390 = vadd.f32 %v1381, %v1388
        %v1391 = vadd.f32 %v1382, %v1388
        %v1392 = vmax.f32 %v1390, 0.0
        %v1393 = vmax.f32 %v1391, 0.0
        %v1394 = vpack.c.bf16 %v1393, %v1392
        %v1395 = vrot.slane %v1392, 7
        %v1396 = vrot.slane %v1393, 7
        %v1397 = vsel %vm681, %v1395, %v1396
        %v1398 = vsel %vm681, %v1396, %v1395
        %v1399 = vsel %vm671, 0.0, %v1398
        %v1400 = vsel %vm672, 0.0, %v1397
        %v1401 = vpack.c.bf16 %v1400, %v1399
        %v1402 = vrot.slane %v1392, 1
        %v1403 = vrot.slane %v1393, 1
        %v1404 = vsel %vm689, %v1402, %v1403
        %v1405 = vsel %vm689, %v1403, %v1402
        %v1406 = vsel %vm673, 0.0, %v1404
        %v1407 = vsel %vm674, 0.0, %v1405
        %v1408 = vpack.c.bf16 %v1407, %v1406
        %s1409 = scalar_lea.vmem [#allocation7], 64
        %v1410 = vld [vmem:[%s1409] sm:$0xf]
        %v1411 = vld [vmem:[%s1409 + $0x4] sm:$0xf]
        %v1412 = vld [vmem:[%s1409 + $0x8] sm:$0xf]
        %v1413 = vld [vmem:[%s1409 + $0xc] sm:$0xf]
        %v1414 = vld [vmem:[%s1409 + $0x10] sm:$0xf]
        %v1415 = vld [vmem:[%s1409 + $0x14] sm:$0xf]
        %v1416 = vld [vmem:[%s1409 + $0x18] sm:$0xf]
        %v1417 = vld [vmem:[%s1409 + $0x1c] sm:$0xf]
        %v1418 = vld [vmem:[%s1409 + $0x20] sm:$0xf]
        %v1419 = vld [vmem:[%s1409 + $0x24] sm:$0xf]
        %v1420 = vld [vmem:[%s1409 + $0x28] sm:$0xf]
        %v1421 = vld [vmem:[%s1409 + $0x2c] sm:$0xf]
        %v1422 = vld [vmem:[%s1409 + $0x30] sm:$0xf]
        %v1423 = vld [vmem:[%s1409 + $0x34] sm:$0xf]
        %v1424 = vld [vmem:[%s1409 + $0x38] sm:$0xf]
        %v1425 = vld [vmem:[%s1409 + $0x3c] sm:$0xf]
        %v1426 = vld [vmem:[#allocation7] sm:$0xf]
        %v1427 = vld [vmem:[#allocation7 + $0x4] sm:$0xf]
        %v1428 = vld [vmem:[#allocation7 + $0x8] sm:$0xf]
        %v1429 = vld [vmem:[#allocation7 + $0xc] sm:$0xf]
        %v1430 = vld [vmem:[#allocation7 + $0x10] sm:$0xf]
        %v1431 = vld [vmem:[#allocation7 + $0x14] sm:$0xf]
        %v1432 = vld [vmem:[#allocation7 + $0x18] sm:$0xf]
        %v1433 = vld [vmem:[#allocation7 + $0x1c] sm:$0xf]
        %v1434 = vld [vmem:[#allocation7 + $0x20] sm:$0xf]
        %v1435 = vld [vmem:[#allocation7 + $0x24] sm:$0xf]
        %v1436 = vld [vmem:[#allocation7 + $0x28] sm:$0xf]
        %v1437 = vld [vmem:[#allocation7 + $0x2c] sm:$0xf]
        %v1438 = vld [vmem:[#allocation7 + $0x30] sm:$0xf]
        %v1439 = vld [vmem:[#allocation7 + $0x34] sm:$0xf]
        %v1440 = vld [vmem:[#allocation7 + $0x38] sm:$0xf]
        %v1441 = vld [vmem:[#allocation7 + $0x3c] sm:$0xf]
        %v1458 = vunpack.c.l.b16 %v1426
        %v1459 = vunpack.c.l.b16 %v1427
        %v1460 = vunpack.c.l.b16 %v1428
        %v1461 = vunpack.c.l.b16 %v1429
        %v1462 = vunpack.c.l.b16 %v1430
        %v1463 = vunpack.c.l.b16 %v1431
        %v1464 = vunpack.c.l.b16 %v1432
        %v1465 = vunpack.c.l.b16 %v1433
        %v1466 = vunpack.c.l.b16 %v1434
        %v1467 = vunpack.c.l.b16 %v1435
        %v1468 = vunpack.c.l.b16 %v1436
        %v1469 = vunpack.c.l.b16 %v1437
        %v1470 = vunpack.c.l.b16 %v1438
        %v1471 = vunpack.c.l.b16 %v1439
        %v1472 = vunpack.c.l.b16 %v1440
        %v1473 = vunpack.c.l.b16 %v1441
        %v1474 = vpack.c.b16 %v1459, %v1458
        %v1475 = vpack.c.b16 %v1461, %v1460
        %v1476 = vpack.c.b16 %v1463, %v1462
        %v1477 = vpack.c.b16 %v1465, %v1464
        %v1478 = vpack.c.b16 %v1467, %v1466
        %v1479 = vpack.c.b16 %v1469, %v1468
        %v1480 = vpack.c.b16 %v1471, %v1470
        %v1481 = vpack.c.b16 %v1473, %v1472
        %1490 = vmatprep.subr.bf16.mxu0 0
        %1491 = vmatpush1.bf16.msra.mxu0 %v1474
        %1492 = vmatprep.subr.bf16.mxu0 0
        %1493 = vmatpush1.bf16.msra.mxu0 %v1475
        %1494 = vmatprep.subr.bf16.mxu0 0
        %1495 = vmatpush1.bf16.msra.mxu0 %v1476
        %1496 = vmatprep.subr.bf16.mxu0 0
        %1497 = vmatpush1.bf16.msra.mxu0 %v1477
        %1498 = vmatprep.subr.bf16.mxu0 0
        %1499 = vmatpush1.bf16.msra.mxu0 %v1478
        %1500 = vmatprep.subr.bf16.mxu0 0
        %1501 = vmatpush1.bf16.msra.mxu0 %v1479
        %1502 = vmatprep.subr.bf16.mxu0 0
        %1503 = vmatpush1.bf16.msra.mxu0 %v1480
        %1504 = vmatprep.subr.bf16.mxu0 0
        %1505 = vmatpush1.bf16.msra.mxu0 %v1481
        %1506 = vmatprep.subr.bf16.mxu0 0
        %1507 = vmatpush1.bf16.msra.mxu0 0
        %1508 = vmatprep.subr.bf16.mxu0 0
        %1509 = vmatpush1.bf16.msra.mxu0 0
        %1510 = vmatprep.subr.bf16.mxu0 0
        %1511 = vmatpush1.bf16.msra.mxu0 0
        %1512 = vmatprep.subr.bf16.mxu0 0
        %1513 = vmatpush1.bf16.msra.mxu0 0
        %1514 = vmatprep.subr.bf16.mxu0 0
        %1515 = vmatpush1.bf16.msra.mxu0 0
        %1516 = vmatprep.subr.bf16.mxu0 0
        %1517 = vmatpush1.bf16.msra.mxu0 0
        %1518 = vmatprep.subr.bf16.mxu0 0
        %1519 = vmatpush1.bf16.msra.mxu0 0
        %1520 = vmatprep.subr.bf16.mxu0 0
        %1521 = vmatpush1.bf16.msra.mxu0 0
        %1522 = vmatprep.mubr.bf16.mxu0 0
        %1523 = vmatmul.mubr.bf16.gmra.mrb[0].mxu0 %v1401
        %v1524 = vpop.f32.mrb[0].mxu0
        %v1525 = vadd.f32 0.0, %v1524
        %v1526 = vpop.f32.mrb[0].mxu0
        %v1527 = vpop.f32.mrb[0].mxu0
        %v1528 = vadd.f32 0.0, %v1527
        %v1529 = vpop.f32.mrb[0].mxu0
        %1530 = vdwg.mxu0
        %v1547 = vunpack.c.l.b16 %v1410
        %v1548 = vunpack.c.l.b16 %v1411
        %v1549 = vunpack.c.l.b16 %v1412
        %v1550 = vunpack.c.l.b16 %v1413
        %v1551 = vunpack.c.l.b16 %v1414
        %v1552 = vunpack.c.l.b16 %v1415
        %v1553 = vunpack.c.l.b16 %v1416
        %v1554 = vunpack.c.l.b16 %v1417
        %v1555 = vunpack.c.l.b16 %v1418
        %v1556 = vunpack.c.l.b16 %v1419
        %v1557 = vunpack.c.l.b16 %v1420
        %v1558 = vunpack.c.l.b16 %v1421
        %v1559 = vunpack.c.l.b16 %v1422
        %v1560 = vunpack.c.l.b16 %v1423
        %v1561 = vunpack.c.l.b16 %v1424
        %v1562 = vunpack.c.l.b16 %v1425
        %v1563 = vpack.c.b16 %v1548, %v1547
        %v1564 = vpack.c.b16 %v1550, %v1549
        %v1565 = vpack.c.b16 %v1552, %v1551
        %v1566 = vpack.c.b16 %v1554, %v1553
        %v1567 = vpack.c.b16 %v1556, %v1555
        %v1568 = vpack.c.b16 %v1558, %v1557
        %v1569 = vpack.c.b16 %v1560, %v1559
        %v1570 = vpack.c.b16 %v1562, %v1561
        %1579 = vmatprep.subr.bf16.mxu0 0
        %1580 = vmatpush1.bf16.msra.mxu0 %v1563
        %1581 = vmatprep.subr.bf16.mxu0 0
        %1582 = vmatpush1.bf16.msra.mxu0 %v1564
        %1583 = vmatprep.subr.bf16.mxu0 0
        %1584 = vmatpush1.bf16.msra.mxu0 %v1565
        %1585 = vmatprep.subr.bf16.mxu0 0
        %1586 = vmatpush1.bf16.msra.mxu0 %v1566
        %1587 = vmatprep.subr.bf16.mxu0 0
        %1588 = vmatpush1.bf16.msra.mxu0 %v1567
        %1589 = vmatprep.subr.bf16.mxu0 0
        %1590 = vmatpush1.bf16.msra.mxu0 %v1568
        %1591 = vmatprep.subr.bf16.mxu0 0
        %1592 = vmatpush1.bf16.msra.mxu0 %v1569
        %1593 = vmatprep.subr.bf16.mxu0 0
        %1594 = vmatpush1.bf16.msra.mxu0 %v1570
        %1595 = vmatprep.subr.bf16.mxu0 0
        %1596 = vmatpush1.bf16.msra.mxu0 0
        %1597 = vmatprep.subr.bf16.mxu0 0
        %1598 = vmatpush1.bf16.msra.mxu0 0
        %1599 = vmatprep.subr.bf16.mxu0 0
        %1600 = vmatpush1.bf16.msra.mxu0 0
        %1601 = vmatprep.subr.bf16.mxu0 0
        %1602 = vmatpush1.bf16.msra.mxu0 0
        %1603 = vmatprep.subr.bf16.mxu0 0
        %1604 = vmatpush1.bf16.msra.mxu0 0
        %1605 = vmatprep.subr.bf16.mxu0 0
        %1606 = vmatpush1.bf16.msra.mxu0 0
        %1607 = vmatprep.subr.bf16.mxu0 0
        %1608 = vmatpush1.bf16.msra.mxu0 0
        %1609 = vmatprep.subr.bf16.mxu0 0
        %1610 = vmatpush1.bf16.msra.mxu0 0
        %1611 = vmatprep.mubr.bf16.mxu0 0
        %1612 = vmatmul.mubr.bf16.gmra.mrb[0].mxu0 %v1394
        %v1613 = vpop.f32.mrb[0].mxu0
        %v1614 = vadd.f32 %v1525, %v1613
        %v1615 = vpop.f32.mrb[0].mxu0
        %v1616 = vpop.f32.mrb[0].mxu0
        %v1617 = vadd.f32 %v1528, %v1616
        %v1618 = vpop.f32.mrb[0].mxu0
        %1619 = vdwg.mxu0
        %s1620 = scalar_lea.vmem [#allocation7], 128
        %v1621 = vld [vmem:[%s1620] sm:$0xf]
        %v1622 = vld [vmem:[%s1620 + $0x4] sm:$0xf]
        %v1623 = vld [vmem:[%s1620 + $0x8] sm:$0xf]
        %v1624 = vld [vmem:[%s1620 + $0xc] sm:$0xf]
        %v1625 = vld [vmem:[%s1620 + $0x10] sm:$0xf]
        %v1626 = vld [vmem:[%s1620 + $0x14] sm:$0xf]
        %v1627 = vld [vmem:[%s1620 + $0x18] sm:$0xf]
        %v1628 = vld [vmem:[%s1620 + $0x1c] sm:$0xf]
        %v1629 = vld [vmem:[%s1620 + $0x20] sm:$0xf]
        %v1630 = vld [vmem:[%s1620 + $0x24] sm:$0xf]
        %v1631 = vld [vmem:[%s1620 + $0x28] sm:$0xf]
        %v1632 = vld [vmem:[%s1620 + $0x2c] sm:$0xf]
        %v1633 = vld [vmem:[%s1620 + $0x30] sm:$0xf]
        %v1634 = vld [vmem:[%s1620 + $0x34] sm:$0xf]
        %v1635 = vld [vmem:[%s1620 + $0x38] sm:$0xf]
        %v1636 = vld [vmem:[%s1620 + $0x3c] sm:$0xf]
        %v1653 = vunpack.c.l.b16 %v1621
        %v1654 = vunpack.c.l.b16 %v1622
        %v1655 = vunpack.c.l.b16 %v1623
        %v1656 = vunpack.c.l.b16 %v1624
        %v1657 = vunpack.c.l.b16 %v1625
        %v1658 = vunpack.c.l.b16 %v1626
        %v1659 = vunpack.c.l.b16 %v1627
        %v1660 = vunpack.c.l.b16 %v1628
        %v1661 = vunpack.c.l.b16 %v1629
        %v1662 = vunpack.c.l.b16 %v1630
        %v1663 = vunpack.c.l.b16 %v1631
        %v1664 = vunpack.c.l.b16 %v1632
        %v1665 = vunpack.c.l.b16 %v1633
        %v1666 = vunpack.c.l.b16 %v1634
        %v1667 = vunpack.c.l.b16 %v1635
        %v1668 = vunpack.c.l.b16 %v1636
        %v1669 = vpack.c.b16 %v1654, %v1653
        %v1670 = vpack.c.b16 %v1656, %v1655
        %v1671 = vpack.c.b16 %v1658, %v1657
        %v1672 = vpack.c.b16 %v1660, %v1659
        %v1673 = vpack.c.b16 %v1662, %v1661
        %v1674 = vpack.c.b16 %v1664, %v1663
        %v1675 = vpack.c.b16 %v1666, %v1665
        %v1676 = vpack.c.b16 %v1668, %v1667
        %1685 = vmatprep.subr.bf16.mxu0 0
        %1686 = vmatpush1.bf16.msra.mxu0 %v1669
        %1687 = vmatprep.subr.bf16.mxu0 0
        %1688 = vmatpush1.bf16.msra.mxu0 %v1670
        %1689 = vmatprep.subr.bf16.mxu0 0
        %1690 = vmatpush1.bf16.msra.mxu0 %v1671
        %1691 = vmatprep.subr.bf16.mxu0 0
        %1692 = vmatpush1.bf16.msra.mxu0 %v1672
        %1693 = vmatprep.subr.bf16.mxu0 0
        %1694 = vmatpush1.bf16.msra.mxu0 %v1673
        %1695 = vmatprep.subr.bf16.mxu0 0
        %1696 = vmatpush1.bf16.msra.mxu0 %v1674
        %1697 = vmatprep.subr.bf16.mxu0 0
        %1698 = vmatpush1.bf16.msra.mxu0 %v1675
        %1699 = vmatprep.subr.bf16.mxu0 0
        %1700 = vmatpush1.bf16.msra.mxu0 %v1676
        %1701 = vmatprep.subr.bf16.mxu0 0
        %1702 = vmatpush1.bf16.msra.mxu0 0
        %1703 = vmatprep.subr.bf16.mxu0 0
        %1704 = vmatpush1.bf16.msra.mxu0 0
        %1705 = vmatprep.subr.bf16.mxu0 0
        %1706 = vmatpush1.bf16.msra.mxu0 0
        %1707 = vmatprep.subr.bf16.mxu0 0
        %1708 = vmatpush1.bf16.msra.mxu0 0
        %1709 = vmatprep.subr.bf16.mxu0 0
        %1710 = vmatpush1.bf16.msra.mxu0 0
        %1711 = vmatprep.subr.bf16.mxu0 0
        %1712 = vmatpush1.bf16.msra.mxu0 0
        %1713 = vmatprep.subr.bf16.mxu0 0
        %1714 = vmatpush1.bf16.msra.mxu0 0
        %1715 = vmatprep.subr.bf16.mxu0 0
        %1716 = vmatpush1.bf16.msra.mxu0 0
        %1717 = vmatprep.mubr.bf16.mxu0 0
        %1718 = vmatmul.mubr.bf16.gmra.mrb[0].mxu0 %v1408
        %v1719 = vpop.f32.mrb[0].mxu0
        %v1720 = vadd.f32 0.0, %v1719
        %v1721 = vpop.f32.mrb[0].mxu0
        %v1722 = vpop.f32.mrb[0].mxu0
        %v1723 = vadd.f32 0.0, %v1722
        %v1724 = vpop.f32.mrb[0].mxu0
        %1725 = vdwg.mxu0
        %v1726 = vadd.f32 %v1614, %v1720
        %v1727 = vadd.f32 %v1617, %v1723
        %v1728 = vld [vmem:[%s8] sm:$0x1]
        %v1730 = vlaneseq
        %v1731 = vshrl.u32 %v1730, 7
        %v1732 = vsub.s32 0, %v1731
        %v1733 = vrot.slane %v1728, %v1732
        %v1735 = vmul.f32 %v1726, %v1733
        %v1736 = vmul.f32 %v1727, %v1733
        %v1737 = vld [vmem:[%s9] sm:$0x1]
        %v1739 = vlaneseq
        %v1740 = vshrl.u32 %v1739, 7
        %v1741 = vsub.s32 0, %v1740
        %v1742 = vrot.slane %v1737, %v1741
        %v1744 = vadd.f32 %v1735, %v1742
        %v1745 = vadd.f32 %v1736, %v1742
        %v1746 = vadd.f32 %v1038, %v1744
        %v1747 = vadd.f32 %v1039, %v1745
        %v1748 = vmax.f32 %v1746, 0.0
        %v1749 = vmax.f32 %v1747, 0.0
        %v1750 = vpack.c.bf16 %v1749, %v1748
        %v1751 = vrot.slane %v1748, 7
        %v1752 = vrot.slane %v1749, 7
        %v1753 = vsel %vm681, %v1751, %v1752
        %v1754 = vsel %vm681, %v1752, %v1751
        %v1755 = vsel %vm671, 0.0, %v1754
        %v1756 = vsel %vm672, 0.0, %v1753
        %v1757 = vpack.c.bf16 %v1756, %v1755
        %v1758 = vrot.slane %v1748, 1
        %v1759 = vrot.slane %v1749, 1
        %v1760 = vsel %vm689, %v1758, %v1759
        %v1761 = vsel %vm689, %v1759, %v1758
        %v1762 = vsel %vm673, 0.0, %v1760
        %v1763 = vsel %vm674, 0.0, %v1761
        %v1764 = vpack.c.bf16 %v1763, %v1762
        %s1765 = scalar_lea.vmem [#allocation9], 64
        %v1766 = vld [vmem:[%s1765] sm:$0xf]
        %v1767 = vld [vmem:[%s1765 + $0x4] sm:$0xf]
        %v1768 = vld [vmem:[%s1765 + $0x8] sm:$0xf]
        %v1769 = vld [vmem:[%s1765 + $0xc] sm:$0xf]
        %v1770 = vld [vmem:[%s1765 + $0x10] sm:$0xf]
        %v1771 = vld [vmem:[%s1765 + $0x14] sm:$0xf]
        %v1772 = vld [vmem:[%s1765 + $0x18] sm:$0xf]
        %v1773 = vld [vmem:[%s1765 + $0x1c] sm:$0xf]
        %v1774 = vld [vmem:[%s1765 + $0x20] sm:$0xf]
        %v1775 = vld [vmem:[%s1765 + $0x24] sm:$0xf]
        %v1776 = vld [vmem:[%s1765 + $0x28] sm:$0xf]
        %v1777 = vld [vmem:[%s1765 + $0x2c] sm:$0xf]
        %v1778 = vld [vmem:[%s1765 + $0x30] sm:$0xf]
        %v1779 = vld [vmem:[%s1765 + $0x34] sm:$0xf]
        %v1780 = vld [vmem:[%s1765 + $0x38] sm:$0xf]
        %v1781 = vld [vmem:[%s1765 + $0x3c] sm:$0xf]
        %v1782 = vld [vmem:[#allocation9] sm:$0xf]
        %v1783 = vld [vmem:[#allocation9 + $0x4] sm:$0xf]
        %v1784 = vld [vmem:[#allocation9 + $0x8] sm:$0xf]
        %v1785 = vld [vmem:[#allocation9 + $0xc] sm:$0xf]
        %v1786 = vld [vmem:[#allocation9 + $0x10] sm:$0xf]
        %v1787 = vld [vmem:[#allocation9 + $0x14] sm:$0xf]
        %v1788 = vld [vmem:[#allocation9 + $0x18] sm:$0xf]
        %v1789 = vld [vmem:[#allocation9 + $0x1c] sm:$0xf]
        %v1790 = vld [vmem:[#allocation9 + $0x20] sm:$0xf]
        %v1791 = vld [vmem:[#allocation9 + $0x24] sm:$0xf]
        %v1792 = vld [vmem:[#allocation9 + $0x28] sm:$0xf]
        %v1793 = vld [vmem:[#allocation9 + $0x2c] sm:$0xf]
        %v1794 = vld [vmem:[#allocation9 + $0x30] sm:$0xf]
        %v1795 = vld [vmem:[#allocation9 + $0x34] sm:$0xf]
        %v1796 = vld [vmem:[#allocation9 + $0x38] sm:$0xf]
        %v1797 = vld [vmem:[#allocation9 + $0x3c] sm:$0xf]
        %v1814 = vunpack.c.l.b16 %v1782
        %v1815 = vunpack.c.l.b16 %v1783
        %v1816 = vunpack.c.l.b16 %v1784
        %v1817 = vunpack.c.l.b16 %v1785
        %v1818 = vunpack.c.l.b16 %v1786
        %v1819 = vunpack.c.l.b16 %v1787
        %v1820 = vunpack.c.l.b16 %v1788
        %v1821 = vunpack.c.l.b16 %v1789
        %v1822 = vunpack.c.l.b16 %v1790
        %v1823 = vunpack.c.l.b16 %v1791
        %v1824 = vunpack.c.l.b16 %v1792
        %v1825 = vunpack.c.l.b16 %v1793
        %v1826 = vunpack.c.l.b16 %v1794
        %v1827 = vunpack.c.l.b16 %v1795
        %v1828 = vunpack.c.l.b16 %v1796
        %v1829 = vunpack.c.l.b16 %v1797
        %v1830 = vpack.c.b16 %v1815, %v1814
        %v1831 = vpack.c.b16 %v1817, %v1816
        %v1832 = vpack.c.b16 %v1819, %v1818
        %v1833 = vpack.c.b16 %v1821, %v1820
        %v1834 = vpack.c.b16 %v1823, %v1822
        %v1835 = vpack.c.b16 %v1825, %v1824
        %v1836 = vpack.c.b16 %v1827, %v1826
        %v1837 = vpack.c.b16 %v1829, %v1828
        %1846 = vmatprep.subr.bf16.mxu0 0
        %1847 = vmatpush1.bf16.msra.mxu0 %v1830
        %1848 = vmatprep.subr.bf16.mxu0 0
        %1849 = vmatpush1.bf16.msra.mxu0 %v1831
        %1850 = vmatprep.subr.bf16.mxu0 0
        %1851 = vmatpush1.bf16.msra.mxu0 %v1832
        %1852 = vmatprep.subr.bf16.mxu0 0
        %1853 = vmatpush1.bf16.msra.mxu0 %v1833
        %1854 = vmatprep.subr.bf16.mxu0 0
        %1855 = vmatpush1.bf16.msra.mxu0 %v1834
        %1856 = vmatprep.subr.bf16.mxu0 0
        %1857 = vmatpush1.bf16.msra.mxu0 %v1835
        %1858 = vmatprep.subr.bf16.mxu0 0
        %1859 = vmatpush1.bf16.msra.mxu0 %v1836
        %1860 = vmatprep.subr.bf16.mxu0 0
        %1861 = vmatpush1.bf16.msra.mxu0 %v1837
        %1862 = vmatprep.subr.bf16.mxu0 0
        %1863 = vmatpush1.bf16.msra.mxu0 0
        %1864 = vmatprep.subr.bf16.mxu0 0
        %1865 = vmatpush1.bf16.msra.mxu0 0
        %1866 = vmatprep.subr.bf16.mxu0 0
        %1867 = vmatpush1.bf16.msra.mxu0 0
        %1868 = vmatprep.subr.bf16.mxu0 0
        %1869 = vmatpush1.bf16.msra.mxu0 0
        %1870 = vmatprep.subr.bf16.mxu0 0
        %1871 = vmatpush1.bf16.msra.mxu0 0
        %1872 = vmatprep.subr.bf16.mxu0 0
        %1873 = vmatpush1.bf16.msra.mxu0 0
        %1874 = vmatprep.subr.bf16.mxu0 0
        %1875 = vmatpush1.bf16.msra.mxu0 0
        %1876 = vmatprep.subr.bf16.mxu0 0
        %1877 = vmatpush1.bf16.msra.mxu0 0
        %1878 = vmatprep.mubr.bf16.mxu0 0
        %1879 = vmatmul.mubr.bf16.gmra.mrb[0].mxu0 %v1757
        %v1880 = vpop.f32.mrb[0].mxu0
        %v1881 = vadd.f32 0.0, %v1880
        %v1882 = vpop.f32.mrb[0].mxu0
        %v1883 = vpop.f32.mrb[0].mxu0
        %v1884 = vadd.f32 0.0, %v1883
        %v1885 = vpop.f32.mrb[0].mxu0
        %1886 = vdwg.mxu0
        %v1903 = vunpack.c.l.b16 %v1766
        %v1904 = vunpack.c.l.b16 %v1767
        %v1905 = vunpack.c.l.b16 %v1768
        %v1906 = vunpack.c.l.b16 %v1769
        %v1907 = vunpack.c.l.b16 %v1770
        %v1908 = vunpack.c.l.b16 %v1771
        %v1909 = vunpack.c.l.b16 %v1772
        %v1910 = vunpack.c.l.b16 %v1773
        %v1911 = vunpack.c.l.b16 %v1774
        %v1912 = vunpack.c.l.b16 %v1775
        %v1913 = vunpack.c.l.b16 %v1776
        %v1914 = vunpack.c.l.b16 %v1777
        %v1915 = vunpack.c.l.b16 %v1778
        %v1916 = vunpack.c.l.b16 %v1779
        %v1917 = vunpack.c.l.b16 %v1780
        %v1918 = vunpack.c.l.b16 %v1781
        %v1919 = vpack.c.b16 %v1904, %v1903
        %v1920 = vpack.c.b16 %v1906, %v1905
        %v1921 = vpack.c.b16 %v1908, %v1907
        %v1922 = vpack.c.b16 %v1910, %v1909
        %v1923 = vpack.c.b16 %v1912, %v1911
        %v1924 = vpack.c.b16 %v1914, %v1913
        %v1925 = vpack.c.b16 %v1916, %v1915
        %v1926 = vpack.c.b16 %v1918, %v1917
        %1935 = vmatprep.subr.bf16.mxu0 0
        %1936 = vmatpush1.bf16.msra.mxu0 %v1919
        %1937 = vmatprep.subr.bf16.mxu0 0
        %1938 = vmatpush1.bf16.msra.mxu0 %v1920
        %1939 = vmatprep.subr.bf16.mxu0 0
        %1940 = vmatpush1.bf16.msra.mxu0 %v1921
        %1941 = vmatprep.subr.bf16.mxu0 0
        %1942 = vmatpush1.bf16.msra.mxu0 %v1922
        %1943 = vmatprep.subr.bf16.mxu0 0
        %1944 = vmatpush1.bf16.msra.mxu0 %v1923
        %1945 = vmatprep.subr.bf16.mxu0 0
        %1946 = vmatpush1.bf16.msra.mxu0 %v1924
        %1947 = vmatprep.subr.bf16.mxu0 0
        %1948 = vmatpush1.bf16.msra.mxu0 %v1925
        %1949 = vmatprep.subr.bf16.mxu0 0
        %1950 = vmatpush1.bf16.msra.mxu0 %v1926
        %1951 = vmatprep.subr.bf16.mxu0 0
        %1952 = vmatpush1.bf16.msra.mxu0 0
        %1953 = vmatprep.subr.bf16.mxu0 0
        %1954 = vmatpush1.bf16.msra.mxu0 0
        %1955 = vmatprep.subr.bf16.mxu0 0
        %1956 = vmatpush1.bf16.msra.mxu0 0
        %1957 = vmatprep.subr.bf16.mxu0 0
        %1958 = vmatpush1.bf16.msra.mxu0 0
        %1959 = vmatprep.subr.bf16.mxu0 0
        %1960 = vmatpush1.bf16.msra.mxu0 0
        %1961 = vmatprep.subr.bf16.mxu0 0
        %1962 = vmatpush1.bf16.msra.mxu0 0
        %1963 = vmatprep.subr.bf16.mxu0 0
        %1964 = vmatpush1.bf16.msra.mxu0 0
        %1965 = vmatprep.subr.bf16.mxu0 0
        %1966 = vmatpush1.bf16.msra.mxu0 0
        %1967 = vmatprep.mubr.bf16.mxu0 0
        %1968 = vmatmul.mubr.bf16.gmra.mrb[0].mxu0 %v1750
        %v1969 = vpop.f32.mrb[0].mxu0
        %v1970 = vadd.f32 %v1881, %v1969
        %v1971 = vpop.f32.mrb[0].mxu0
        %v1972 = vpop.f32.mrb[0].mxu0
        %v1973 = vadd.f32 %v1884, %v1972
        %v1974 = vpop.f32.mrb[0].mxu0
        %1975 = vdwg.mxu0
        %s1976 = scalar_lea.vmem [#allocation9], 128
        %v1977 = vld [vmem:[%s1976] sm:$0xf]
        %v1978 = vld [vmem:[%s1976 + $0x4] sm:$0xf]
        %v1979 = vld [vmem:[%s1976 + $0x8] sm:$0xf]
        %v1980 = vld [vmem:[%s1976 + $0xc] sm:$0xf]
        %v1981 = vld [vmem:[%s1976 + $0x10] sm:$0xf]
        %v1982 = vld [vmem:[%s1976 + $0x14] sm:$0xf]
        %v1983 = vld [vmem:[%s1976 + $0x18] sm:$0xf]
        %v1984 = vld [vmem:[%s1976 + $0x1c] sm:$0xf]
        %v1985 = vld [vmem:[%s1976 + $0x20] sm:$0xf]
        %v1986 = vld [vmem:[%s1976 + $0x24] sm:$0xf]
        %v1987 = vld [vmem:[%s1976 + $0x28] sm:$0xf]
        %v1988 = vld [vmem:[%s1976 + $0x2c] sm:$0xf]
        %v1989 = vld [vmem:[%s1976 + $0x30] sm:$0xf]
        %v1990 = vld [vmem:[%s1976 + $0x34] sm:$0xf]
        %v1991 = vld [vmem:[%s1976 + $0x38] sm:$0xf]
        %v1992 = vld [vmem:[%s1976 + $0x3c] sm:$0xf]
        %v2009 = vunpack.c.l.b16 %v1977
        %v2010 = vunpack.c.l.b16 %v1978
        %v2011 = vunpack.c.l.b16 %v1979
        %v2012 = vunpack.c.l.b16 %v1980
        %v2013 = vunpack.c.l.b16 %v1981
        %v2014 = vunpack.c.l.b16 %v1982
        %v2015 = vunpack.c.l.b16 %v1983
        %v2016 = vunpack.c.l.b16 %v1984
        %v2017 = vunpack.c.l.b16 %v1985
        %v2018 = vunpack.c.l.b16 %v1986
        %v2019 = vunpack.c.l.b16 %v1987
        %v2020 = vunpack.c.l.b16 %v1988
        %v2021 = vunpack.c.l.b16 %v1989
        %v2022 = vunpack.c.l.b16 %v1990
        %v2023 = vunpack.c.l.b16 %v1991
        %v2024 = vunpack.c.l.b16 %v1992
        %v2025 = vpack.c.b16 %v2010, %v2009
        %v2026 = vpack.c.b16 %v2012, %v2011
        %v2027 = vpack.c.b16 %v2014, %v2013
        %v2028 = vpack.c.b16 %v2016, %v2015
        %v2029 = vpack.c.b16 %v2018, %v2017
        %v2030 = vpack.c.b16 %v2020, %v2019
        %v2031 = vpack.c.b16 %v2022, %v2021
        %v2032 = vpack.c.b16 %v2024, %v2023
        %2041 = vmatprep.subr.bf16.mxu0 0
        %2042 = vmatpush1.bf16.msra.mxu0 %v2025
        %2043 = vmatprep.subr.bf16.mxu0 0
        %2044 = vmatpush1.bf16.msra.mxu0 %v2026
        %2045 = vmatprep.subr.bf16.mxu0 0
        %2046 = vmatpush1.bf16.msra.mxu0 %v2027
        %2047 = vmatprep.subr.bf16.mxu0 0
        %2048 = vmatpush1.bf16.msra.mxu0 %v2028
        %2049 = vmatprep.subr.bf16.mxu0 0
        %2050 = vmatpush1.bf16.msra.mxu0 %v2029
        %2051 = vmatprep.subr.bf16.mxu0 0
        %2052 = vmatpush1.bf16.msra.mxu0 %v2030
        %2053 = vmatprep.subr.bf16.mxu0 0
        %2054 = vmatpush1.bf16.msra.mxu0 %v2031
        %2055 = vmatprep.subr.bf16.mxu0 0
        %2056 = vmatpush1.bf16.msra.mxu0 %v2032
        %2057 = vmatprep.subr.bf16.mxu0 0
        %2058 = vmatpush1.bf16.msra.mxu0 0
        %2059 = vmatprep.subr.bf16.mxu0 0
        %2060 = vmatpush1.bf16.msra.mxu0 0
        %2061 = vmatprep.subr.bf16.mxu0 0
        %2062 = vmatpush1.bf16.msra.mxu0 0
        %2063 = vmatprep.subr.bf16.mxu0 0
        %2064 = vmatpush1.bf16.msra.mxu0 0
        %2065 = vmatprep.subr.bf16.mxu0 0
        %2066 = vmatpush1.bf16.msra.mxu0 0
        %2067 = vmatprep.subr.bf16.mxu0 0
        %2068 = vmatpush1.bf16.msra.mxu0 0
        %2069 = vmatprep.subr.bf16.mxu0 0
        %2070 = vmatpush1.bf16.msra.mxu0 0
        %2071 = vmatprep.subr.bf16.mxu0 0
        %2072 = vmatpush1.bf16.msra.mxu0 0
        %2073 = vmatprep.mubr.bf16.mxu0 0
        %2074 = vmatmul.mubr.bf16.gmra.mrb[0].mxu0 %v1764
        %v2075 = vpop.f32.mrb[0].mxu0
        %v2076 = vadd.f32 0.0, %v2075
        %v2077 = vpop.f32.mrb[0].mxu0
        %v2078 = vpop.f32.mrb[0].mxu0
        %v2079 = vadd.f32 0.0, %v2078
        %v2080 = vpop.f32.mrb[0].mxu0
        %2081 = vdwg.mxu0
        %v2082 = vadd.f32 %v1970, %v2076
        %v2083 = vadd.f32 %v1973, %v2079
        %v2084 = vld [vmem:[%s11] sm:$0x1]
        %v2086 = vlaneseq
        %v2087 = vshrl.u32 %v2086, 7
        %v2088 = vsub.s32 0, %v2087
        %v2089 = vrot.slane %v2084, %v2088
        %v2091 = vmul.f32 %v2082, %v2089
        %v2092 = vmul.f32 %v2083, %v2089
        %v2093 = vld [vmem:[%s12] sm:$0x1]
        %v2095 = vlaneseq
        %v2096 = vshrl.u32 %v2095, 7
        %v2097 = vsub.s32 0, %v2096
        %v2098 = vrot.slane %v2093, %v2097
        %v2100 = vadd.f32 %v2091, %v2098
        %v2101 = vadd.f32 %v2092, %v2098
        %v2102 = vmax.f32 %v2100, 0.0
        %v2103 = vmax.f32 %v2101, 0.0
        %v2104 = vpack.c.bf16 %v2103, %v2102
        %v2105 = vrot.slane %v2102, 7
        %v2106 = vrot.slane %v2103, 7
        %v2107 = vsel %vm681, %v2105, %v2106
        %v2108 = vsel %vm681, %v2106, %v2105
        %v2109 = vsel %vm671, 0.0, %v2108
        %v2110 = vsel %vm672, 0.0, %v2107
        %v2111 = vpack.c.bf16 %v2110, %v2109
        %v2112 = vrot.slane %v2102, 1
        %v2113 = vrot.slane %v2103, 1
        %v2114 = vsel %vm689, %v2112, %v2113
        %v2115 = vsel %vm689, %v2113, %v2112
        %v2116 = vsel %vm673, 0.0, %v2114
        %v2117 = vsel %vm674, 0.0, %v2115
        %v2118 = vpack.c.bf16 %v2117, %v2116
        %s2119 = scalar_lea.vmem [#allocation10], 64
        %v2120 = vld [vmem:[%s2119] sm:$0xf]
        %v2121 = vld [vmem:[%s2119 + $0x4] sm:$0xf]
        %v2122 = vld [vmem:[%s2119 + $0x8] sm:$0xf]
        %v2123 = vld [vmem:[%s2119 + $0xc] sm:$0xf]
        %v2124 = vld [vmem:[%s2119 + $0x10] sm:$0xf]
        %v2125 = vld [vmem:[%s2119 + $0x14] sm:$0xf]
        %v2126 = vld [vmem:[%s2119 + $0x18] sm:$0xf]
        %v2127 = vld [vmem:[%s2119 + $0x1c] sm:$0xf]
        %v2128 = vld [vmem:[%s2119 + $0x20] sm:$0xf]
        %v2129 = vld [vmem:[%s2119 + $0x24] sm:$0xf]
        %v2130 = vld [vmem:[%s2119 + $0x28] sm:$0xf]
        %v2131 = vld [vmem:[%s2119 + $0x2c] sm:$0xf]
        %v2132 = vld [vmem:[%s2119 + $0x30] sm:$0xf]
        %v2133 = vld [vmem:[%s2119 + $0x34] sm:$0xf]
        %v2134 = vld [vmem:[%s2119 + $0x38] sm:$0xf]
        %v2135 = vld [vmem:[%s2119 + $0x3c] sm:$0xf]
        %v2136 = vld [vmem:[#allocation10] sm:$0xf]
        %v2137 = vld [vmem:[#allocation10 + $0x4] sm:$0xf]
        %v2138 = vld [vmem:[#allocation10 + $0x8] sm:$0xf]
        %v2139 = vld [vmem:[#allocation10 + $0xc] sm:$0xf]
        %v2140 = vld [vmem:[#allocation10 + $0x10] sm:$0xf]
        %v2141 = vld [vmem:[#allocation10 + $0x14] sm:$0xf]
        %v2142 = vld [vmem:[#allocation10 + $0x18] sm:$0xf]
        %v2143 = vld [vmem:[#allocation10 + $0x1c] sm:$0xf]
        %v2144 = vld [vmem:[#allocation10 + $0x20] sm:$0xf]
        %v2145 = vld [vmem:[#allocation10 + $0x24] sm:$0xf]
        %v2146 = vld [vmem:[#allocation10 + $0x28] sm:$0xf]
        %v2147 = vld [vmem:[#allocation10 + $0x2c] sm:$0xf]
        %v2148 = vld [vmem:[#allocation10 + $0x30] sm:$0xf]
        %v2149 = vld [vmem:[#allocation10 + $0x34] sm:$0xf]
        %v2150 = vld [vmem:[#allocation10 + $0x38] sm:$0xf]
        %v2151 = vld [vmem:[#allocation10 + $0x3c] sm:$0xf]
        %v2168 = vunpack.c.l.b16 %v2136
        %v2169 = vunpack.c.l.b16 %v2137
        %v2170 = vunpack.c.l.b16 %v2138
        %v2171 = vunpack.c.l.b16 %v2139
        %v2172 = vunpack.c.l.b16 %v2140
        %v2173 = vunpack.c.l.b16 %v2141
        %v2174 = vunpack.c.l.b16 %v2142
        %v2175 = vunpack.c.l.b16 %v2143
        %v2176 = vunpack.c.l.b16 %v2144
        %v2177 = vunpack.c.l.b16 %v2145
        %v2178 = vunpack.c.l.b16 %v2146
        %v2179 = vunpack.c.l.b16 %v2147
        %v2180 = vunpack.c.l.b16 %v2148
        %v2181 = vunpack.c.l.b16 %v2149
        %v2182 = vunpack.c.l.b16 %v2150
        %v2183 = vunpack.c.l.b16 %v2151
        %v2184 = vpack.c.b16 %v2169, %v2168
        %v2185 = vpack.c.b16 %v2171, %v2170
        %v2186 = vpack.c.b16 %v2173, %v2172
        %v2187 = vpack.c.b16 %v2175, %v2174
        %v2188 = vpack.c.b16 %v2177, %v2176
        %v2189 = vpack.c.b16 %v2179, %v2178
        %v2190 = vpack.c.b16 %v2181, %v2180
        %v2191 = vpack.c.b16 %v2183, %v2182
        %2200 = vmatprep.subr.bf16.mxu0 0
        %2201 = vmatpush1.bf16.msra.mxu0 %v2184
        %2202 = vmatprep.subr.bf16.mxu0 0
        %2203 = vmatpush1.bf16.msra.mxu0 %v2185
        %2204 = vmatprep.subr.bf16.mxu0 0
        %2205 = vmatpush1.bf16.msra.mxu0 %v2186
        %2206 = vmatprep.subr.bf16.mxu0 0
        %2207 = vmatpush1.bf16.msra.mxu0 %v2187
        %2208 = vmatprep.subr.bf16.mxu0 0
        %2209 = vmatpush1.bf16.msra.mxu0 %v2188
        %2210 = vmatprep.subr.bf16.mxu0 0
        %2211 = vmatpush1.bf16.msra.mxu0 %v2189
        %2212 = vmatprep.subr.bf16.mxu0 0
        %2213 = vmatpush1.bf16.msra.mxu0 %v2190
        %2214 = vmatprep.subr.bf16.mxu0 0
        %2215 = vmatpush1.bf16.msra.mxu0 %v2191
        %2216 = vmatprep.subr.bf16.mxu0 0
        %2217 = vmatpush1.bf16.msra.mxu0 0
        %2218 = vmatprep.subr.bf16.mxu0 0
        %2219 = vmatpush1.bf16.msra.mxu0 0
        %2220 = vmatprep.subr.bf16.mxu0 0
        %2221 = vmatpush1.bf16.msra.mxu0 0
        %2222 = vmatprep.subr.bf16.mxu0 0
        %2223 = vmatpush1.bf16.msra.mxu0 0
        %2224 = vmatprep.subr.bf16.mxu0 0
        %2225 = vmatpush1.bf16.msra.mxu0 0
        %2226 = vmatprep.subr.bf16.mxu0 0
        %2227 = vmatpush1.bf16.msra.mxu0 0
        %2228 = vmatprep.subr.bf16.mxu0 0
        %2229 = vmatpush1.bf16.msra.mxu0 0
        %2230 = vmatprep.subr.bf16.mxu0 0
        %2231 = vmatpush1.bf16.msra.mxu0 0
        %2232 = vmatprep.mubr.bf16.mxu0 0
        %2233 = vmatmul.mubr.bf16.gmra.mrb[0].mxu0 %v2111
        %v2234 = vpop.f32.mrb[0].mxu0
        %v2235 = vadd.f32 0.0, %v2234
        %v2236 = vpop.f32.mrb[0].mxu0
        %v2237 = vpop.f32.mrb[0].mxu0
        %v2238 = vadd.f32 0.0, %v2237
        %v2239 = vpop.f32.mrb[0].mxu0
        %2240 = vdwg.mxu0
        %v2257 = vunpack.c.l.b16 %v2120
        %v2258 = vunpack.c.l.b16 %v2121
        %v2259 = vunpack.c.l.b16 %v2122
        %v2260 = vunpack.c.l.b16 %v2123
        %v2261 = vunpack.c.l.b16 %v2124
        %v2262 = vunpack.c.l.b16 %v2125
        %v2263 = vunpack.c.l.b16 %v2126
        %v2264 = vunpack.c.l.b16 %v2127
        %v2265 = vunpack.c.l.b16 %v2128
        %v2266 = vunpack.c.l.b16 %v2129
        %v2267 = vunpack.c.l.b16 %v2130
        %v2268 = vunpack.c.l.b16 %v2131
        %v2269 = vunpack.c.l.b16 %v2132
        %v2270 = vunpack.c.l.b16 %v2133
        %v2271 = vunpack.c.l.b16 %v2134
        %v2272 = vunpack.c.l.b16 %v2135
        %v2273 = vpack.c.b16 %v2258, %v2257
        %v2274 = vpack.c.b16 %v2260, %v2259
        %v2275 = vpack.c.b16 %v2262, %v2261
        %v2276 = vpack.c.b16 %v2264, %v2263
        %v2277 = vpack.c.b16 %v2266, %v2265
        %v2278 = vpack.c.b16 %v2268, %v2267
        %v2279 = vpack.c.b16 %v2270, %v2269
        %v2280 = vpack.c.b16 %v2272, %v2271
        %2289 = vmatprep.subr.bf16.mxu0 0
        %2290 = vmatpush1.bf16.msra.mxu0 %v2273
        %2291 = vmatprep.subr.bf16.mxu0 0
        %2292 = vmatpush1.bf16.msra.mxu0 %v2274
        %2293 = vmatprep.subr.bf16.mxu0 0
        %2294 = vmatpush1.bf16.msra.mxu0 %v2275
        %2295 = vmatprep.subr.bf16.mxu0 0
        %2296 = vmatpush1.bf16.msra.mxu0 %v2276
        %2297 = vmatprep.subr.bf16.mxu0 0
        %2298 = vmatpush1.bf16.msra.mxu0 %v2277
        %2299 = vmatprep.subr.bf16.mxu0 0
        %2300 = vmatpush1.bf16.msra.mxu0 %v2278
        %2301 = vmatprep.subr.bf16.mxu0 0
        %2302 = vmatpush1.bf16.msra.mxu0 %v2279
        %2303 = vmatprep.subr.bf16.mxu0 0
        %2304 = vmatpush1.bf16.msra.mxu0 %v2280
        %2305 = vmatprep.subr.bf16.mxu0 0
        %2306 = vmatpush1.bf16.msra.mxu0 0
        %2307 = vmatprep.subr.bf16.mxu0 0
        %2308 = vmatpush1.bf16.msra.mxu0 0
        %2309 = vmatprep.subr.bf16.mxu0 0
        %2310 = vmatpush1.bf16.msra.mxu0 0
        %2311 = vmatprep.subr.bf16.mxu0 0
        %2312 = vmatpush1.bf16.msra.mxu0 0
        %2313 = vmatprep.subr.bf16.mxu0 0
        %2314 = vmatpush1.bf16.msra.mxu0 0
        %2315 = vmatprep.subr.bf16.mxu0 0
        %2316 = vmatpush1.bf16.msra.mxu0 0
        %2317 = vmatprep.subr.bf16.mxu0 0
        %2318 = vmatpush1.bf16.msra.mxu0 0
        %2319 = vmatprep.subr.bf16.mxu0 0
        %2320 = vmatpush1.bf16.msra.mxu0 0
        %2321 = vmatprep.mubr.bf16.mxu0 0
        %2322 = vmatmul.mubr.bf16.gmra.mrb[0].mxu0 %v2104
        %v2323 = vpop.f32.mrb[0].mxu0
        %v2324 = vadd.f32 %v2235, %v2323
        %v2325 = vpop.f32.mrb[0].mxu0
        %v2326 = vpop.f32.mrb[0].mxu0
        %v2327 = vadd.f32 %v2238, %v2326
        %v2328 = vpop.f32.mrb[0].mxu0
        %2329 = vdwg.mxu0
        %s2330 = scalar_lea.vmem [#allocation10], 128
        %v2331 = vld [vmem:[%s2330] sm:$0xf]
        %v2332 = vld [vmem:[%s2330 + $0x4] sm:$0xf]
        %v2333 = vld [vmem:[%s2330 + $0x8] sm:$0xf]
        %v2334 = vld [vmem:[%s2330 + $0xc] sm:$0xf]
        %v2335 = vld [vmem:[%s2330 + $0x10] sm:$0xf]
        %v2336 = vld [vmem:[%s2330 + $0x14] sm:$0xf]
        %v2337 = vld [vmem:[%s2330 + $0x18] sm:$0xf]
        %v2338 = vld [vmem:[%s2330 + $0x1c] sm:$0xf]
        %v2339 = vld [vmem:[%s2330 + $0x20] sm:$0xf]
        %v2340 = vld [vmem:[%s2330 + $0x24] sm:$0xf]
        %v2341 = vld [vmem:[%s2330 + $0x28] sm:$0xf]
        %v2342 = vld [vmem:[%s2330 + $0x2c] sm:$0xf]
        %v2343 = vld [vmem:[%s2330 + $0x30] sm:$0xf]
        %v2344 = vld [vmem:[%s2330 + $0x34] sm:$0xf]
        %v2345 = vld [vmem:[%s2330 + $0x38] sm:$0xf]
        %v2346 = vld [vmem:[%s2330 + $0x3c] sm:$0xf]
        %v2363 = vunpack.c.l.b16 %v2331
        %v2364 = vunpack.c.l.b16 %v2332
        %v2365 = vunpack.c.l.b16 %v2333
        %v2366 = vunpack.c.l.b16 %v2334
        %v2367 = vunpack.c.l.b16 %v2335
        %v2368 = vunpack.c.l.b16 %v2336
        %v2369 = vunpack.c.l.b16 %v2337
        %v2370 = vunpack.c.l.b16 %v2338
        %v2371 = vunpack.c.l.b16 %v2339
        %v2372 = vunpack.c.l.b16 %v2340
        %v2373 = vunpack.c.l.b16 %v2341
        %v2374 = vunpack.c.l.b16 %v2342
        %v2375 = vunpack.c.l.b16 %v2343
        %v2376 = vunpack.c.l.b16 %v2344
        %v2377 = vunpack.c.l.b16 %v2345
        %v2378 = vunpack.c.l.b16 %v2346
        %v2379 = vpack.c.b16 %v2364, %v2363
        %v2380 = vpack.c.b16 %v2366, %v2365
        %v2381 = vpack.c.b16 %v2368, %v2367
        %v2382 = vpack.c.b16 %v2370, %v2369
        %v2383 = vpack.c.b16 %v2372, %v2371
        %v2384 = vpack.c.b16 %v2374, %v2373
        %v2385 = vpack.c.b16 %v2376, %v2375
        %v2386 = vpack.c.b16 %v2378, %v2377
        %2395 = vmatprep.subr.bf16.mxu0 0
        %2396 = vmatpush1.bf16.msra.mxu0 %v2379
        %2397 = vmatprep.subr.bf16.mxu0 0
        %2398 = vmatpush1.bf16.msra.mxu0 %v2380
        %2399 = vmatprep.subr.bf16.mxu0 0
        %2400 = vmatpush1.bf16.msra.mxu0 %v2381
        %2401 = vmatprep.subr.bf16.mxu0 0
        %2402 = vmatpush1.bf16.msra.mxu0 %v2382
        %2403 = vmatprep.subr.bf16.mxu0 0
        %2404 = vmatpush1.bf16.msra.mxu0 %v2383
        %2405 = vmatprep.subr.bf16.mxu0 0
        %2406 = vmatpush1.bf16.msra.mxu0 %v2384
        %2407 = vmatprep.subr.bf16.mxu0 0
        %2408 = vmatpush1.bf16.msra.mxu0 %v2385
        %2409 = vmatprep.subr.bf16.mxu0 0
        %2410 = vmatpush1.bf16.msra.mxu0 %v2386
        %2411 = vmatprep.subr.bf16.mxu0 0
        %2412 = vmatpush1.bf16.msra.mxu0 0
        %2413 = vmatprep.subr.bf16.mxu0 0
        %2414 = vmatpush1.bf16.msra.mxu0 0
        %2415 = vmatprep.subr.bf16.mxu0 0
        %2416 = vmatpush1.bf16.msra.mxu0 0
        %2417 = vmatprep.subr.bf16.mxu0 0
        %2418 = vmatpush1.bf16.msra.mxu0 0
        %2419 = vmatprep.subr.bf16.mxu0 0
        %2420 = vmatpush1.bf16.msra.mxu0 0
        %2421 = vmatprep.subr.bf16.mxu0 0
        %2422 = vmatpush1.bf16.msra.mxu0 0
        %2423 = vmatprep.subr.bf16.mxu0 0
        %2424 = vmatpush1.bf16.msra.mxu0 0
        %2425 = vmatprep.subr.bf16.mxu0 0
        %2426 = vmatpush1.bf16.msra.mxu0 0
        %2427 = vmatprep.mubr.bf16.mxu0 0
        %2428 = vmatmul.mubr.bf16.gmra.mrb[0].mxu0 %v2118
        %v2429 = vpop.f32.mrb[0].mxu0
        %v2430 = vadd.f32 0.0, %v2429
        %v2431 = vpop.f32.mrb[0].mxu0
        %v2432 = vpop.f32.mrb[0].mxu0
        %v2433 = vadd.f32 0.0, %v2432
        %v2434 = vpop.f32.mrb[0].mxu0
        %2435 = vdwg.mxu0
        %v2436 = vadd.f32 %v2324, %v2430
        %v2437 = vadd.f32 %v2327, %v2433
        %v2438 = vld [vmem:[%s14] sm:$0x1]
        %v2440 = vlaneseq
        %v2441 = vshrl.u32 %v2440, 7
        %v2442 = vsub.s32 0, %v2441
        %v2443 = vrot.slane %v2438, %v2442
        %v2445 = vmul.f32 %v2436, %v2443
        %v2446 = vmul.f32 %v2437, %v2443
        %v2447 = vld [vmem:[%s15] sm:$0x1]
        %v2449 = vlaneseq
        %v2450 = vshrl.u32 %v2449, 7
        %v2451 = vsub.s32 0, %v2450
        %v2452 = vrot.slane %v2447, %v2451
        %v2454 = vadd.f32 %v2445, %v2452
        %v2455 = vadd.f32 %v2446, %v2452
        %v2456 = vadd.f32 %v1748, %v2454
        %v2457 = vadd.f32 %v1749, %v2455
        %v2458 = vmax.f32 %v2456, 0.0
        %v2459 = vmax.f32 %v2457, 0.0
        %v2460 = vadd.f32 %v2458, %v2459
        %v2461 = vrot.slane %v2460, 4
        %v2462 = vadd.f32 %v2460, %v2461
        %v2463 = vrot.slane %v2462, 2
        %v2464 = vadd.f32 %v2462, %v2463
        %v2465 = vrot.slane %v2464, 1
        %v2466 = vadd.f32 %v2464, %v2465
        %v2467 = vld [vmem:[%s16] sm:$0xff]
        %v2468 = vmul.f32 %v2466, %v2467
        %2469 = vadd.xlane.f32.xlu0 %v2468
        %v2470 = vpop.xlane.xlu0 %2469
        %v2471 = vld [vmem:[%s17] sm:$0xff]
        %v2472 = vadd.f32 %v2470, %v2471
        %vm2473 = vcmask 7168
        %2474 = vst.msk [vmem:[%s666] sm:$0xff] %vm2473, %v2472
        %p2475 = scmp.lt.s32.totalorder %s35, 1
        %s2476 = scalar_select %p2475, %s35, 1
        %s2477 = smul.addr %s2476, 8
        %s2478 = scalar_lea.vmem %s18, %s2477
        // Predicated region
        $region117: #{tpu_custom_call.1} parent=91 // pred_check
          %p2479 = pneg %p436
        $region118: #{tpu_custom_call.1} parent=91 // pred_check_branch
          %2481 = sbr.rel (%p2479) target = $region120
        $region119: #{tpu_custom_call.1} parent=91 // pred_region
          _
        $region120: #{tpu_custom_call.1} parent=91 // pred_fallthru
          _
      $region92: #{tpu_custom_call.1} parent=5 // pred_fallthru
        _
      %p2482 = scmp.le.s32.totalorder 2, %s30
      // Predicated region
      $region121: #{tpu_custom_call.1} parent=5 // pred_check
        %p2483 = pneg %p2482
      $region122: #{tpu_custom_call.1} parent=5 // pred_check_branch
        %2485 = sbr.rel (%p2483) target = $region124
      $region123: #{tpu_custom_call.1} parent=5 // pred_region
        %s2486 = ssub.s32 %s30, 2
        // Predicated region
        $region125: #{tpu_custom_call.1} parent=123 // pred_check
          %p2487 = pneg %p442
        $region126: #{tpu_custom_call.1} parent=123 // pred_check_branch
          %2489 = sbr.rel (%p2487) target = $region128
        $region127: #{tpu_custom_call.1} parent=123 // pred_region
          %p2490 = scmp.lt.s32.totalorder %s36, 1
          %s2491 = scalar_select %p2490, %s36, 1
          %s2492 = smul.addr %s2491, 8
          %s2493 = scalar_lea.vmem %s18, %s2492
        $region128: #{tpu_custom_call.1} parent=123 // pred_fallthru
          _
      $region124: #{tpu_custom_call.1} parent=5 // pred_fallthru
        _
    $region6: #{tpu_custom_call.1} parent=1 // loop_footer
      %s34 = sadd.s32 1, %s30
    $region7: #{tpu_custom_call.1} parent=1 // loop_footer_branch
      %29 = sbr.rel target = $region3
    $region8: #{tpu_custom_call.1} parent=1 // loop_exit
      _
    %2494 = vsyncpa [#allocation3], 1
    %s2495 = scalar_lea.sflag [#allocation3], 1
    %2496 = vsyncpa %s2495, 1
    %2497 = vsyncpa [#allocation5], 1
    %2498 = vsyncpa [#allocation8], 1
    %2499 = vsyncpa [#allocation11], 1

</llo_original>
